<compile_context>
chip_gen: v5e
topology: v5e:2x2
jax: 0.10.0
libtpu: 0.0.40
codegen_flags: <defaults>
</compile_context>

<pallas_src>
import math

import numpy as np
import jax
import jax.numpy as jnp
from jax.experimental import pallas as pl
from jax.experimental.pallas import tpu as pltpu

FEATURE_DIM = 32          # d_model
NUM_HEADS = 4
HEAD_DIM = FEATURE_DIM // NUM_HEADS
B = 2                     # batch
N = 16                    # query length  (x)
M = 16                    # source length (source)
BN_EPS = 1e-5


# --------------------------------------------------------------------------
# Fused kernel: qkv proj + MHA + merge + concat/conv1 + BN + ReLU + conv2
# --------------------------------------------------------------------------
def _fused_attn_prop_kernel(x_ref, s_ref,
                            wq_ref, bq_ref, wkv_ref, bkv_ref,
                            wm_ref, bm_ref,
                            w1x_ref, w1m_ref, b1_ref,
                            gamma_ref, beta_ref, w2_ref, b2_ref,
                            out_ref):
    """Whole problem in one invocation (no grid).

    x_ref  : (B*N, F)   s_ref : (B*M, F)        (channels-last, batch flattened)
    wq     : (F, F)     bq    : (1, F)          (query proj, heads contiguous cols)
    wkv    : (F, 2F)    bkv   : (1, 2F)         (fused key|value proj)
    wm     : (F, F)     bm    : (1, F)          (merge conv)
    w1x/w1m: (F, 2F)    b1    : (1, 2F)         (MLP conv1 split over cat([x, msg]))
    gamma/beta : (1, 2F)                        (BatchNorm1d, training-mode stats)
    w2     : (2F, F)    b2    : (1, F)          (MLP conv2)
    out_ref: (B*N, F)
    """
    f32 = jnp.float32
    F = FEATURE_DIM
    x = x_ref[...]                                                   # (B*N, F)
    s = s_ref[...]                                                   # (B*M, F)

    # ---- fused q / kv projections (single full-width matmuls) ----
    q = jnp.dot(x, wq_ref[...], preferred_element_type=f32) + bq_ref[...]     # (B*N, F)
    kv = jnp.dot(s, wkv_ref[...], preferred_element_type=f32) + bkv_ref[...]  # (B*M, 2F)

    q3 = q.reshape(B, N, F)
    k3 = kv[:, :F].reshape(B, M, F)
    v3 = kv[:, F:].reshape(B, M, F)

    # ---- multi-head attention (static head loop, batched over B) ----
    inv_sqrt_d = 1.0 / math.sqrt(HEAD_DIM)
    head_outs = []
    for h in range(NUM_HEADS):                     # static unroll, H small
        lo = h * HEAD_DIM
        qh = q3[:, :, lo:lo + HEAD_DIM]            # (B, N, d)
        kh = k3[:, :, lo:lo + HEAD_DIM]            # (B, M, d)
        vh = v3[:, :, lo:lo + HEAD_DIM]            # (B, M, d)
        sc = jnp.einsum('bnd,bmd->bnm', qh, kh,
                        preferred_element_type=f32) * inv_sqrt_d     # (B, N, M)
        sc = sc - jnp.max(sc, axis=-1, keepdims=True)
        e = jnp.exp(sc)
        p = e * pl.reciprocal(jnp.sum(e, axis=-1, keepdims=True), approx=True)
        head_outs.append(jnp.einsum('bnm,bmd->bnd', p, vh,
                                    preferred_element_type=f32))     # (B, N, d)
    # heads contiguous in the lane dimension -> merge is ONE matmul
    o = jnp.concatenate(head_outs, axis=-1).reshape(B * N, F)        # (B*N, F)

    # ---- merge conv + MLP conv1 on cat([x, message]) (split matmul) ----
    msg = jnp.dot(o, wm_ref[...], preferred_element_type=f32) + bm_ref[...]
    h1 = (jnp.dot(x, w1x_ref[...], preferred_element_type=f32)
          + jnp.dot(msg, w1m_ref[...], preferred_element_type=f32)
          + b1_ref[...])                                             # (B*N, 2F)

    # ---- BatchNorm1d (training-mode batch stats, biased var) + ReLU ----
    mean = jnp.mean(h1, axis=0, keepdims=True)                       # (1, 2F)
    diff = h1 - mean
    var = jnp.mean(diff * diff, axis=0, keepdims=True)               # biased, as torch
    xn = diff * jax.lax.rsqrt(var + BN_EPS) * gamma_ref[...] + beta_ref[...]
    a = jnp.maximum(xn, 0.0)

    # ---- MLP conv2 ----
    out_ref[...] = (jnp.dot(a, w2_ref[...], preferred_element_type=f32)
                    + b2_ref[...])


# --------------------------------------------------------------------------
# pallas_call wrapper (whole forward under one jit)
# --------------------------------------------------------------------------
def _run_fused(x2d, s2d, kp):
    vmem = pl.BlockSpec(memory_space=pltpu.MemorySpace.VMEM)
    return pl.pallas_call(
        _fused_attn_prop_kernel,
        out_shape=jax.ShapeDtypeStruct((B * N, FEATURE_DIM), jnp.float32),
        in_specs=[vmem] * 15,
        out_specs=vmem,
    )(x2d, s2d,
      kp["wq"], kp["bq"], kp["wkv"], kp["bkv"],
      kp["wm"], kp["bm"], kp["w1x"], kp["w1m"], kp["b1"],
      kp["gamma"], kp["beta"], kp["w2"], kp["b2"])


@jax.jit
def attentional_propagation(x_bfn, src_bfm, kp):
    """x_bfn: (B, F, N), src_bfm: (B, F, M) in PyTorch NCL layout -> (B, F, N).

    kp must be the precomputed kernel-layout params from to_kernel_params()
    (relayout is NOT done per forward call).
    """
    x2d = jnp.transpose(x_bfn, (0, 2, 1)).reshape(B * N, FEATURE_DIM)
    s2d = jnp.transpose(src_bfm, (0, 2, 1)).reshape(B * M, FEATURE_DIM)
    out2d = _run_fused(x2d, s2d, kp)                   # (B*N, F)
    return jnp.transpose(out2d.reshape(B, N, FEATURE_DIM), (0, 2, 1))


# --------------------------------------------------------------------------
# Parameters (deterministic, synthetic) and ONE-TIME layout conversion
# --------------------------------------------------------------------------
def init_params(key):
    F = FEATURE_DIM
    ks = jax.random.split(key, 10)

    def w(k, shape):
        return 0.1 * jax.random.normal(k, shape, jnp.float32)

    return dict(
        # MultiHeadedAttention: 3 projection convs + merge conv (all (out,in) 1x1)
        wq=w(ks[0], (F, F)), bq=w(ks[1], (F,)),
        wk=w(ks[2], (F, F)), bk=w(ks[3], (F,)),
        wv=w(ks[4], (F, F)), bv=w(ks[5], (F,)),
        wm=w(ks[6], (F, F)), bm=w(ks[7], (F,)),
        # MLP([2F, 2F, F]): conv1 + BN(2F) + ReLU + conv2 (bias of conv2 := 0)
        w1=w(ks[8], (2 * F, 2 * F)), b1=w(ks[9], (2 * F,)),
        gamma=jnp.ones((2 * F,), jnp.float32), beta=jnp.zeros((2 * F,), jnp.float32),
        w2=w(jax.random.fold_in(key, 99), (F, 2 * F)),
        b2=jnp.zeros((F,), jnp.float32),
    )


def to_kernel_params(p):
    """One-time relayout of PyTorch-convention weights for the fused kernel.

    PyTorch head split view(B, dim, H, L): output channel c -> (d_idx=c//H,
    head=c%H).  The kernel wants head h's dims contiguous in columns
    [h*d, (h+1)*d), so projection output columns (and merge input rows) are
    permuted head-major here.  Math is identical; done once outside the jit.
    """
    F, H, d = FEATURE_DIM, NUM_HEADS, HEAD_DIM
    perm = np.array([di * H + h for h in range(H) for di in range(d)], dtype=np.int32)

    def proj(wt, bt):
        wk = jnp.asarray(np.asarray(wt).T[:, perm])              # (F, F)
        bk = jnp.asarray(np.asarray(bt)[perm]).reshape(1, F)     # (1, F)
        return wk, bk

    wq, bq = proj(p["wq"], p["bq"])
    wk, bk = proj(p["wk"], p["bk"])
    wv, bv = proj(p["wv"], p["bv"])
    wm = jnp.asarray(np.asarray(p["wm"])[:, perm].T)             # (F, F)

    return dict(
        wq=wq, bq=bq,
        wkv=jnp.concatenate([wk, wv], axis=1),                   # (F, 2F) fused k|v
        bkv=jnp.concatenate([bk, bv], axis=1),                   # (1, 2F)
        wm=wm, bm=p["bm"].reshape(1, F),
        w1x=p["w1"][:, :F].T, w1m=p["w1"][:, F:].T, b1=p["b1"].reshape(1, 2 * F),
        gamma=p["gamma"].reshape(1, 2 * F), beta=p["beta"].reshape(1, 2 * F),
        w2=p["w2"].T, b2=p["b2"].reshape(1, F),
    )


# --------------------------------------------------------------------------
# Pure-JAX reference following the PyTorch code verbatim (for validation)
# --------------------------------------------------------------------------
def reference(x, src, p):
    F, H, d = FEATURE_DIM, NUM_HEADS, HEAD_DIM
    hi = jax.lax.Precision.HIGHEST

    def conv1d(w, b, t):
        return jnp.einsum('oi,bin->bon', w, t, precision=hi) + b[None, :, None]

    q = conv1d(p["wq"], p["bq"], x).reshape(B, d, H, N)
    k = conv1d(p["wk"], p["bk"], src).reshape(B, d, H, M)
    v = conv1d(p["wv"], p["bv"], src).reshape(B, d, H, M)
    scores = jnp.einsum('bdhn,bdhm->bhnm', q, k, precision=hi) / math.sqrt(d)
    prob = jax.nn.softmax(scores, axis=-1)
    o = jnp.einsum('bhnm,bdhm->bdhn', prob, v, precision=hi).reshape(B, F, N)
    message = conv1d(p["wm"], p["bm"], o)
    cat = jnp.concatenate([x, message], axis=1)                    # (B, 2F, N)
    h1 = conv1d(p["w1"], p["b1"], cat)
    mean = jnp.mean(h1, axis=(0, 2), keepdims=True)
    var = jnp.mean((h1 - mean) ** 2, axis=(0, 2), keepdims=True)   # biased (training BN)
    xn = (h1 - mean) / jnp.sqrt(var + BN_EPS)
    xn = xn * p["gamma"][None, :, None] + p["beta"][None, :, None]
    a = jnp.maximum(xn, 0.0)
    return conv1d(p["w2"], p["b2"], a)


if __name__ == "__main__":
    key = jax.random.PRNGKey(0)
    kx, ks, kparam = jax.random.split(key, 3)
    x = jax.random.normal(kx, (B, FEATURE_DIM, N), jnp.float32)
    source = jax.random.normal(ks, (B, FEATURE_DIM, M), jnp.float32)
    params = init_params(kparam)

    # one-time weight relayout (hoisted out of the hot path)
    kp = to_kernel_params(params)

    out = attentional_propagation(x, source, kp)
    out = jax.block_until_ready(out)
    assert out.shape == (B, FEATURE_DIM, N)

    ref = reference(x, source, params)
    np.testing.assert_allclose(np.asarray(out), np.asarray(ref), rtol=2e-2, atol=2e-2)

    print("KERNEL_OK")
</pallas_src>

<mosaic_0001>
module attributes {stable_mosaic.version = 11 : i64} {
  func.func @_fused_attn_prop_kernel(%arg0: memref<32x32xf32, #tpu.memory_space<vmem>>, %arg1: memref<32x32xf32, #tpu.memory_space<vmem>>, %arg2: memref<32x32xf32, #tpu.memory_space<vmem>>, %arg3: memref<1x32xf32, #tpu.memory_space<vmem>>, %arg4: memref<32x64xf32, #tpu.memory_space<vmem>>, %arg5: memref<1x64xf32, #tpu.memory_space<vmem>>, %arg6: memref<32x32xf32, #tpu.memory_space<vmem>>, %arg7: memref<1x32xf32, #tpu.memory_space<vmem>>, %arg8: memref<32x64xf32, #tpu.memory_space<vmem>>, %arg9: memref<32x64xf32, #tpu.memory_space<vmem>>, %arg10: memref<1x64xf32, #tpu.memory_space<vmem>>, %arg11: memref<1x64xf32, #tpu.memory_space<vmem>>, %arg12: memref<1x64xf32, #tpu.memory_space<vmem>>, %arg13: memref<64x32xf32, #tpu.memory_space<vmem>>, %arg14: memref<1x32xf32, #tpu.memory_space<vmem>>, %arg15: memref<32x32xf32, #tpu.memory_space<vmem>>) attributes {dimension_semantics = [], scalar_prefetch = 0 : i64, scratch_operands = 0 : i64, tpu.core_type = #tpu.core_type<tc>} {
    %c0 = arith.constant 0 : index
    %c0_0 = arith.constant 0 : index
    %0 = vector.load %arg0[%c0, %c0_0] : memref<32x32xf32, #tpu.memory_space<vmem>>, vector<32x32xf32>
    %c0_1 = arith.constant 0 : index
    %c0_2 = arith.constant 0 : index
    %1 = vector.load %arg1[%c0_1, %c0_2] : memref<32x32xf32, #tpu.memory_space<vmem>>, vector<32x32xf32>
    %c0_3 = arith.constant 0 : index
    %c0_4 = arith.constant 0 : index
    %2 = vector.load %arg2[%c0_3, %c0_4] : memref<32x32xf32, #tpu.memory_space<vmem>>, vector<32x32xf32>
    %cst = arith.constant dense<0.000000e+00> : vector<32x32xf32>
    %3 = tpu.matmul %0, %2, %cst {dimension_numbers = #tpu.dot_dimension_numbers<[1], [0], [0], [1], [0, 0, 1, 1], [], []>} : vector<32x32xf32>, vector<32x32xf32>, vector<32x32xf32> -> vector<32x32xf32>
    %c0_5 = arith.constant 0 : index
    %c0_6 = arith.constant 0 : index
    %4 = vector.load %arg3[%c0_5, %c0_6] : memref<1x32xf32, #tpu.memory_space<vmem>>, vector<1x32xf32>
    %5 = vector.broadcast %4 : vector<1x32xf32> to vector<32x32xf32>
    %6 = arith.addf %3, %5 : vector<32x32xf32>
    %c0_7 = arith.constant 0 : index
    %c0_8 = arith.constant 0 : index
    %7 = vector.load %arg4[%c0_7, %c0_8] : memref<32x64xf32, #tpu.memory_space<vmem>>, vector<32x64xf32>
    %cst_9 = arith.constant dense<0.000000e+00> : vector<32x64xf32>
    %8 = tpu.matmul %1, %7, %cst_9 {dimension_numbers = #tpu.dot_dimension_numbers<[1], [0], [0], [1], [0, 0, 1, 1], [], []>} : vector<32x32xf32>, vector<32x64xf32>, vector<32x64xf32> -> vector<32x64xf32>
    %c0_10 = arith.constant 0 : index
    %c0_11 = arith.constant 0 : index
    %9 = vector.load %arg5[%c0_10, %c0_11] : memref<1x64xf32, #tpu.memory_space<vmem>>, vector<1x64xf32>
    %10 = vector.broadcast %9 : vector<1x64xf32> to vector<32x64xf32>
    %11 = arith.addf %8, %10 : vector<32x64xf32>
    %12 = vector.shape_cast %6 : vector<32x32xf32> to vector<2x16x32xf32>
    %13 = vector.extract_strided_slice %11 {offsets = [0, 0], sizes = [32, 32], strides = [1, 1]} : vector<32x64xf32> to vector<32x32xf32>
    %14 = vector.shape_cast %13 : vector<32x32xf32> to vector<2x16x32xf32>
    %15 = vector.extract_strided_slice %11 {offsets = [0, 32], sizes = [32, 32], strides = [1, 1]} : vector<32x64xf32> to vector<32x32xf32>
    %16 = vector.shape_cast %15 : vector<32x32xf32> to vector<2x16x32xf32>
    %17 = vector.extract_strided_slice %12 {offsets = [0, 0, 0], sizes = [2, 16, 8], strides = [1, 1, 1]} : vector<2x16x32xf32> to vector<2x16x8xf32>
    %18 = vector.extract_strided_slice %14 {offsets = [0, 0, 0], sizes = [2, 16, 8], strides = [1, 1, 1]} : vector<2x16x32xf32> to vector<2x16x8xf32>
    %19 = vector.extract_strided_slice %16 {offsets = [0, 0, 0], sizes = [2, 16, 8], strides = [1, 1, 1]} : vector<2x16x32xf32> to vector<2x16x8xf32>
    "tpu.trace_start"() <{level = 10 : i32, message = "bnd,bmd->bnm"}> : () -> ()
    %cst_12 = arith.constant dense<0.000000e+00> : vector<2x16x16xf32>
    %20 = tpu.matmul %17, %18, %cst_12 {dimension_numbers = #tpu.dot_dimension_numbers<[2], [2], [1], [1], [0, 0, 0, 1, 1, 1], [0], [0]>} : vector<2x16x8xf32>, vector<2x16x8xf32>, vector<2x16x16xf32> -> vector<2x16x16xf32>
    "tpu.trace_stop"() : () -> ()
    %cst_13 = arith.constant 0.353553385 : f32
    %21 = vector.broadcast %cst_13 : f32 to vector<2x16x16xf32>
    %22 = arith.mulf %20, %21 : vector<2x16x16xf32>
    %cst_14 = arith.constant dense<0xFF800000> : vector<2x16xf32>
    %23 = vector.multi_reduction <maximumf>, %22, %cst_14 [2] : vector<2x16x16xf32> to vector<2x16xf32>
    %24 = vector.shape_cast %23 : vector<2x16xf32> to vector<2x16x1xf32>
    %25 = vector.broadcast %24 : vector<2x16x1xf32> to vector<2x16x16xf32>
    %26 = arith.subf %22, %25 : vector<2x16x16xf32>
    %27 = math.exp %26 : vector<2x16x16xf32>
    %cst_15 = arith.constant dense<0.000000e+00> : vector<2x16xf32>
    %28 = vector.multi_reduction <add>, %27, %cst_15 [2] : vector<2x16x16xf32> to vector<2x16xf32>
    %29 = vector.shape_cast %28 : vector<2x16xf32> to vector<2x16x1xf32>
    %30 = tpu.reciprocal %29 {approx = true} : vector<2x16x1xf32> -> vector<2x16x1xf32>
    %31 = vector.broadcast %30 : vector<2x16x1xf32> to vector<2x16x16xf32>
    %32 = arith.mulf %27, %31 : vector<2x16x16xf32>
    "tpu.trace_start"() <{level = 10 : i32, message = "bnm,bmd->bnd"}> : () -> ()
    %cst_16 = arith.constant dense<0.000000e+00> : vector<2x16x8xf32>
    %33 = tpu.matmul %32, %19, %cst_16 {dimension_numbers = #tpu.dot_dimension_numbers<[2], [1], [1], [2], [0, 0, 0, 1, 1, 2], [0], [0]>} : vector<2x16x16xf32>, vector<2x16x8xf32>, vector<2x16x8xf32> -> vector<2x16x8xf32>
    "tpu.trace_stop"() : () -> ()
    %34 = vector.extract_strided_slice %12 {offsets = [0, 0, 8], sizes = [2, 16, 8], strides = [1, 1, 1]} : vector<2x16x32xf32> to vector<2x16x8xf32>
    %35 = vector.extract_strided_slice %14 {offsets = [0, 0, 8], sizes = [2, 16, 8], strides = [1, 1, 1]} : vector<2x16x32xf32> to vector<2x16x8xf32>
    %36 = vector.extract_strided_slice %16 {offsets = [0, 0, 8], sizes = [2, 16, 8], strides = [1, 1, 1]} : vector<2x16x32xf32> to vector<2x16x8xf32>
    "tpu.trace_start"() <{level = 10 : i32, message = "bnd,bmd->bnm"}> : () -> ()
    %cst_17 = arith.constant dense<0.000000e+00> : vector<2x16x16xf32>
    %37 = tpu.matmul %34, %35, %cst_17 {dimension_numbers = #tpu.dot_dimension_numbers<[2], [2], [1], [1], [0, 0, 0, 1, 1, 1], [0], [0]>} : vector<2x16x8xf32>, vector<2x16x8xf32>, vector<2x16x16xf32> -> vector<2x16x16xf32>
    "tpu.trace_stop"() : () -> ()
    %cst_18 = arith.constant 0.353553385 : f32
    %38 = vector.broadcast %cst_18 : f32 to vector<2x16x16xf32>
    %39 = arith.mulf %37, %38 : vector<2x16x16xf32>
    %cst_19 = arith.constant dense<0xFF800000> : vector<2x16xf32>
    %40 = vector.multi_reduction <maximumf>, %39, %cst_19 [2] : vector<2x16x16xf32> to vector<2x16xf32>
    %41 = vector.shape_cast %40 : vector<2x16xf32> to vector<2x16x1xf32>
    %42 = vector.broadcast %41 : vector<2x16x1xf32> to vector<2x16x16xf32>
    %43 = arith.subf %39, %42 : vector<2x16x16xf32>
    %44 = math.exp %43 : vector<2x16x16xf32>
    %cst_20 = arith.constant dense<0.000000e+00> : vector<2x16xf32>
    %45 = vector.multi_reduction <add>, %44, %cst_20 [2] : vector<2x16x16xf32> to vector<2x16xf32>
    %46 = vector.shape_cast %45 : vector<2x16xf32> to vector<2x16x1xf32>
    %47 = tpu.reciprocal %46 {approx = true} : vector<2x16x1xf32> -> vector<2x16x1xf32>
    %48 = vector.broadcast %47 : vector<2x16x1xf32> to vector<2x16x16xf32>
    %49 = arith.mulf %44, %48 : vector<2x16x16xf32>
    "tpu.trace_start"() <{level = 10 : i32, message = "bnm,bmd->bnd"}> : () -> ()
    %cst_21 = arith.constant dense<0.000000e+00> : vector<2x16x8xf32>
    %50 = tpu.matmul %49, %36, %cst_21 {dimension_numbers = #tpu.dot_dimension_numbers<[2], [1], [1], [2], [0, 0, 0, 1, 1, 2], [0], [0]>} : vector<2x16x16xf32>, vector<2x16x8xf32>, vector<2x16x8xf32> -> vector<2x16x8xf32>
    "tpu.trace_stop"() : () -> ()
    %51 = vector.extract_strided_slice %12 {offsets = [0, 0, 16], sizes = [2, 16, 8], strides = [1, 1, 1]} : vector<2x16x32xf32> to vector<2x16x8xf32>
    %52 = vector.extract_strided_slice %14 {offsets = [0, 0, 16], sizes = [2, 16, 8], strides = [1, 1, 1]} : vector<2x16x32xf32> to vector<2x16x8xf32>
    %53 = vector.extract_strided_slice %16 {offsets = [0, 0, 16], sizes = [2, 16, 8], strides = [1, 1, 1]} : vector<2x16x32xf32> to vector<2x16x8xf32>
    "tpu.trace_start"() <{level = 10 : i32, message = "bnd,bmd->bnm"}> : () -> ()
    %cst_22 = arith.constant dense<0.000000e+00> : vector<2x16x16xf32>
    %54 = tpu.matmul %51, %52, %cst_22 {dimension_numbers = #tpu.dot_dimension_numbers<[2], [2], [1], [1], [0, 0, 0, 1, 1, 1], [0], [0]>} : vector<2x16x8xf32>, vector<2x16x8xf32>, vector<2x16x16xf32> -> vector<2x16x16xf32>
    "tpu.trace_stop"() : () -> ()
    %cst_23 = arith.constant 0.353553385 : f32
    %55 = vector.broadcast %cst_23 : f32 to vector<2x16x16xf32>
    %56 = arith.mulf %54, %55 : vector<2x16x16xf32>
    %cst_24 = arith.constant dense<0xFF800000> : vector<2x16xf32>
    %57 = vector.multi_reduction <maximumf>, %56, %cst_24 [2] : vector<2x16x16xf32> to vector<2x16xf32>
    %58 = vector.shape_cast %57 : vector<2x16xf32> to vector<2x16x1xf32>
    %59 = vector.broadcast %58 : vector<2x16x1xf32> to vector<2x16x16xf32>
    %60 = arith.subf %56, %59 : vector<2x16x16xf32>
    %61 = math.exp %60 : vector<2x16x16xf32>
    %cst_25 = arith.constant dense<0.000000e+00> : vector<2x16xf32>
    %62 = vector.multi_reduction <add>, %61, %cst_25 [2] : vector<2x16x16xf32> to vector<2x16xf32>
    %63 = vector.shape_cast %62 : vector<2x16xf32> to vector<2x16x1xf32>
    %64 = tpu.reciprocal %63 {approx = true} : vector<2x16x1xf32> -> vector<2x16x1xf32>
    %65 = vector.broadcast %64 : vector<2x16x1xf32> to vector<2x16x16xf32>
    %66 = arith.mulf %61, %65 : vector<2x16x16xf32>
    "tpu.trace_start"() <{level = 10 : i32, message = "bnm,bmd->bnd"}> : () -> ()
    %cst_26 = arith.constant dense<0.000000e+00> : vector<2x16x8xf32>
    %67 = tpu.matmul %66, %53, %cst_26 {dimension_numbers = #tpu.dot_dimension_numbers<[2], [1], [1], [2], [0, 0, 0, 1, 1, 2], [0], [0]>} : vector<2x16x16xf32>, vector<2x16x8xf32>, vector<2x16x8xf32> -> vector<2x16x8xf32>
    "tpu.trace_stop"() : () -> ()
    %68 = vector.extract_strided_slice %12 {offsets = [0, 0, 24], sizes = [2, 16, 8], strides = [1, 1, 1]} : vector<2x16x32xf32> to vector<2x16x8xf32>
    %69 = vector.extract_strided_slice %14 {offsets = [0, 0, 24], sizes = [2, 16, 8], strides = [1, 1, 1]} : vector<2x16x32xf32> to vector<2x16x8xf32>
    %70 = vector.extract_strided_slice %16 {offsets = [0, 0, 24], sizes = [2, 16, 8], strides = [1, 1, 1]} : vector<2x16x32xf32> to vector<2x16x8xf32>
    "tpu.trace_start"() <{level = 10 : i32, message = "bnd,bmd->bnm"}> : () -> ()
    %cst_27 = arith.constant dense<0.000000e+00> : vector<2x16x16xf32>
    %71 = tpu.matmul %68, %69, %cst_27 {dimension_numbers = #tpu.dot_dimension_numbers<[2], [2], [1], [1], [0, 0, 0, 1, 1, 1], [0], [0]>} : vector<2x16x8xf32>, vector<2x16x8xf32>, vector<2x16x16xf32> -> vector<2x16x16xf32>
    "tpu.trace_stop"() : () -> ()
    %cst_28 = arith.constant 0.353553385 : f32
    %72 = vector.broadcast %cst_28 : f32 to vector<2x16x16xf32>
    %73 = arith.mulf %71, %72 : vector<2x16x16xf32>
    %cst_29 = arith.constant dense<0xFF800000> : vector<2x16xf32>
    %74 = vector.multi_reduction <maximumf>, %73, %cst_29 [2] : vector<2x16x16xf32> to vector<2x16xf32>
    %75 = vector.shape_cast %74 : vector<2x16xf32> to vector<2x16x1xf32>
    %76 = vector.broadcast %75 : vector<2x16x1xf32> to vector<2x16x16xf32>
    %77 = arith.subf %73, %76 : vector<2x16x16xf32>
    %78 = math.exp %77 : vector<2x16x16xf32>
    %cst_30 = arith.constant dense<0.000000e+00> : vector<2x16xf32>
    %79 = vector.multi_reduction <add>, %78, %cst_30 [2] : vector<2x16x16xf32> to vector<2x16xf32>
    %80 = vector.shape_cast %79 : vector<2x16xf32> to vector<2x16x1xf32>
    %81 = tpu.reciprocal %80 {approx = true} : vector<2x16x1xf32> -> vector<2x16x1xf32>
    %82 = vector.broadcast %81 : vector<2x16x1xf32> to vector<2x16x16xf32>
    %83 = arith.mulf %78, %82 : vector<2x16x16xf32>
    "tpu.trace_start"() <{level = 10 : i32, message = "bnm,bmd->bnd"}> : () -> ()
    %cst_31 = arith.constant dense<0.000000e+00> : vector<2x16x8xf32>
    %84 = tpu.matmul %83, %70, %cst_31 {dimension_numbers = #tpu.dot_dimension_numbers<[2], [1], [1], [2], [0, 0, 0, 1, 1, 2], [0], [0]>} : vector<2x16x16xf32>, vector<2x16x8xf32>, vector<2x16x8xf32> -> vector<2x16x8xf32>
    "tpu.trace_stop"() : () -> ()
    %85 = tpu.concatenate %33, %50, %67, %84 in 2 : vector<2x16x8xf32>, vector<2x16x8xf32>, vector<2x16x8xf32>, vector<2x16x8xf32> -> vector<2x16x32xf32>
    %86 = vector.shape_cast %85 : vector<2x16x32xf32> to vector<32x32xf32>
    %c0_32 = arith.constant 0 : index
    %c0_33 = arith.constant 0 : index
    %87 = vector.load %arg6[%c0_32, %c0_33] : memref<32x32xf32, #tpu.memory_space<vmem>>, vector<32x32xf32>
    %cst_34 = arith.constant dense<0.000000e+00> : vector<32x32xf32>
    %88 = tpu.matmul %86, %87, %cst_34 {dimension_numbers = #tpu.dot_dimension_numbers<[1], [0], [0], [1], [0, 0, 1, 1], [], []>} : vector<32x32xf32>, vector<32x32xf32>, vector<32x32xf32> -> vector<32x32xf32>
    %c0_35 = arith.constant 0 : index
    %c0_36 = arith.constant 0 : index
    %89 = vector.load %arg7[%c0_35, %c0_36] : memref<1x32xf32, #tpu.memory_space<vmem>>, vector<1x32xf32>
    %90 = vector.broadcast %89 : vector<1x32xf32> to vector<32x32xf32>
    %91 = arith.addf %88, %90 : vector<32x32xf32>
    %c0_37 = arith.constant 0 : index
    %c0_38 = arith.constant 0 : index
    %92 = vector.load %arg8[%c0_37, %c0_38] : memref<32x64xf32, #tpu.memory_space<vmem>>, vector<32x64xf32>
    %cst_39 = arith.constant dense<0.000000e+00> : vector<32x64xf32>
    %93 = tpu.matmul %0, %92, %cst_39 {dimension_numbers = #tpu.dot_dimension_numbers<[1], [0], [0], [1], [0, 0, 1, 1], [], []>} : vector<32x32xf32>, vector<32x64xf32>, vector<32x64xf32> -> vector<32x64xf32>
    %c0_40 = arith.constant 0 : index
    %c0_41 = arith.constant 0 : index
    %94 = vector.load %arg9[%c0_40, %c0_41] : memref<32x64xf32, #tpu.memory_space<vmem>>, vector<32x64xf32>
    %cst_42 = arith.constant dense<0.000000e+00> : vector<32x64xf32>
    %95 = tpu.matmul %91, %94, %cst_42 {dimension_numbers = #tpu.dot_dimension_numbers<[1], [0], [0], [1], [0, 0, 1, 1], [], []>} : vector<32x32xf32>, vector<32x64xf32>, vector<32x64xf32> -> vector<32x64xf32>
    %96 = arith.addf %93, %95 : vector<32x64xf32>
    %c0_43 = arith.constant 0 : index
    %c0_44 = arith.constant 0 : index
    %97 = vector.load %arg10[%c0_43, %c0_44] : memref<1x64xf32, #tpu.memory_space<vmem>>, vector<1x64xf32>
    %98 = vector.broadcast %97 : vector<1x64xf32> to vector<32x64xf32>
    %99 = arith.addf %96, %98 : vector<32x64xf32>
    %cst_45 = arith.constant dense<0.000000e+00> : vector<64xf32>
    %100 = vector.multi_reduction <add>, %99, %cst_45 [0] : vector<32x64xf32> to vector<64xf32>
    %101 = vector.shape_cast %100 : vector<64xf32> to vector<1x64xf32>
    %cst_46 = arith.constant 3.200000e+01 : f32
    %102 = vector.broadcast %cst_46 : f32 to vector<1x64xf32>
    %103 = arith.divf %101, %102 : vector<1x64xf32>
    %104 = vector.broadcast %103 : vector<1x64xf32> to vector<32x64xf32>
    %105 = arith.subf %99, %104 : vector<32x64xf32>
    %106 = arith.mulf %105, %105 : vector<32x64xf32>
    %cst_47 = arith.constant dense<0.000000e+00> : vector<64xf32>
    %107 = vector.multi_reduction <add>, %106, %cst_47 [0] : vector<32x64xf32> to vector<64xf32>
    %108 = vector.shape_cast %107 : vector<64xf32> to vector<1x64xf32>
    %cst_48 = arith.constant 3.200000e+01 : f32
    %109 = vector.broadcast %cst_48 : f32 to vector<1x64xf32>
    %110 = arith.divf %108, %109 : vector<1x64xf32>
    %cst_49 = arith.constant 9.99999974E-6 : f32
    %111 = vector.broadcast %cst_49 : f32 to vector<1x64xf32>
    %112 = arith.addf %110, %111 : vector<1x64xf32>
    %113 = math.rsqrt %112 : vector<1x64xf32>
    %114 = vector.broadcast %113 : vector<1x64xf32> to vector<32x64xf32>
    %115 = arith.mulf %105, %114 : vector<32x64xf32>
    %c0_50 = arith.constant 0 : index
    %c0_51 = arith.constant 0 : index
    %116 = vector.load %arg11[%c0_50, %c0_51] : memref<1x64xf32, #tpu.memory_space<vmem>>, vector<1x64xf32>
    %117 = vector.broadcast %116 : vector<1x64xf32> to vector<32x64xf32>
    %118 = arith.mulf %115, %117 : vector<32x64xf32>
    %c0_52 = arith.constant 0 : index
    %c0_53 = arith.constant 0 : index
    %119 = vector.load %arg12[%c0_52, %c0_53] : memref<1x64xf32, #tpu.memory_space<vmem>>, vector<1x64xf32>
    %120 = vector.broadcast %119 : vector<1x64xf32> to vector<32x64xf32>
    %121 = arith.addf %118, %120 : vector<32x64xf32>
    %cst_54 = arith.constant 0.000000e+00 : f32
    %122 = vector.broadcast %cst_54 : f32 to vector<32x64xf32>
    %123 = arith.maximumf %121, %122 : vector<32x64xf32>
    %c0_55 = arith.constant 0 : index
    %c0_56 = arith.constant 0 : index
    %124 = vector.load %arg13[%c0_55, %c0_56] : memref<64x32xf32, #tpu.memory_space<vmem>>, vector<64x32xf32>
    %cst_57 = arith.constant dense<0.000000e+00> : vector<32x32xf32>
    %125 = tpu.matmul %123, %124, %cst_57 {dimension_numbers = #tpu.dot_dimension_numbers<[1], [0], [0], [1], [0, 0, 1, 1], [], []>} : vector<32x64xf32>, vector<64x32xf32>, vector<32x32xf32> -> vector<32x32xf32>
    %c0_58 = arith.constant 0 : index
    %c0_59 = arith.constant 0 : index
    %126 = vector.load %arg14[%c0_58, %c0_59] : memref<1x32xf32, #tpu.memory_space<vmem>>, vector<1x32xf32>
    %127 = vector.broadcast %126 : vector<1x32xf32> to vector<32x32xf32>
    %128 = arith.addf %125, %127 : vector<32x32xf32>
    %c0_60 = arith.constant 0 : index
    %c0_61 = arith.constant 0 : index
    %129 = vector.load %arg15[%c0_60, %c0_61] : memref<32x32xf32, #tpu.memory_space<vmem>>, vector<32x32xf32>
    tpu.vector_store %arg15[%c0_60, %c0_61], %128 {strides = array<i32>} : memref<32x32xf32, #tpu.memory_space<vmem>>, vector<32x32xf32>,
    return
  }
}

</mosaic_0001>

<llo_original>
// kernel: attentional_propagation.1
$region0: #{attentional_propagation.1}
  #allocation0 [shape = 'u32[]', space=smem, size = 0x4, offset = 0x4, fixed_abs, tag = 'smem constant byte address 0x4 - core index']
  #allocation1 [shape = 'u32[72,128]{1,0:T(1,128)}', space=vmem, size = 0x9000, scoped, tag = 'internal scratch']
  %s0 = inlined_call_operand.vmem [shape: f32[32,32], index: 0, kind: input, shape index: {}]
  %s1 = inlined_call_operand.vmem [shape: f32[32,32], index: 1, kind: input, shape index: {}]
  %s2 = inlined_call_operand.vmem [shape: f32[32,32], index: 2, kind: input, shape index: {}]
  %s3 = inlined_call_operand.vmem [shape: f32[1,32], index: 3, kind: input, shape index: {}]
  %s4 = inlined_call_operand.hbm [shape: f32[32,64], index: 4, kind: input, shape index: {}]
  %s5 = inlined_call_operand.vmem [shape: f32[1,64], index: 5, kind: input, shape index: {}]
  %s6 = inlined_call_operand.hbm [shape: f32[32,32], index: 6, kind: input, shape index: {}]
  %s7 = inlined_call_operand.vmem [shape: f32[1,32], index: 7, kind: input, shape index: {}]
  %s8 = inlined_call_operand.hbm [shape: f32[32,64], index: 8, kind: input, shape index: {}]
  %s9 = inlined_call_operand.hbm [shape: f32[32,64], index: 9, kind: input, shape index: {}]
  %s10 = inlined_call_operand.hbm [shape: f32[1,64], index: 10, kind: input, shape index: {}]
  %s11 = inlined_call_operand.vmem [shape: f32[1,64], index: 11, kind: input, shape index: {}]
  %s12 = inlined_call_operand.vmem [shape: f32[1,64], index: 12, kind: input, shape index: {}]
  %s13 = inlined_call_operand.vmem [shape: f32[64,32], index: 13, kind: input, shape index: {}]
  %s14 = inlined_call_operand.hbm [shape: f32[1,32], index: 14, kind: input, shape index: {}]
  %s15 = inlined_call_operand.hbm [shape: f32[32,32], index: 15, kind: output, shape index: {}]
  %s16 = sld [smem:[#allocation0]]
  $region94: #{attentional_propagation.1} parent=0
    _
  %s18 = ssub.s32 1, %s16
  %s19 = scalar_select 0, %s18, %s16
  $region1: #{attentional_propagation.1} parent=0
    #allocation2 [shape = 'u8[16384]{0}', space=vmem, size = 0x4000, scoped, tag = 'input window, operand 4, single buffered']
    #allocation3 [shape = 's32[1]{0}', space=sflag, size = 0x4, scoped, tag = 'scoped memory for attentional_propagation.1']
    #allocation4 [shape = 's32[1]{0}', space=sflag, size = 0x4, scoped, tag = 'scoped memory for attentional_propagation.1']
    #allocation5 [shape = 'u8[16384]{0}', space=vmem, size = 0x4000, scoped, tag = 'input window, operand 6, single buffered']
    #allocation6 [shape = 's32[1]{0}', space=sflag, size = 0x4, scoped, tag = 'scoped memory for attentional_propagation.1']
    #allocation7 [shape = 'u8[16384]{0}', space=vmem, size = 0x4000, scoped, tag = 'input window, operand 8, single buffered']
    #allocation8 [shape = 'u8[16384]{0}', space=vmem, size = 0x4000, scoped, tag = 'input window, operand 9, single buffered']
    #allocation9 [shape = 's32[1]{0}', space=sflag, size = 0x4, scoped, tag = 'scoped memory for attentional_propagation.1']
    #allocation10 [shape = 'u8[512]{0}', space=vmem, size = 0x400, scoped, tag = 'input window, operand 10, single buffered']
    #allocation11 [shape = 'u8[512]{0}', space=vmem, size = 0x400, scoped, tag = 'input window, operand 14, single buffered']
    #allocation12 [shape = 's32[1]{0}', space=sflag, size = 0x4, scoped, tag = 'scoped memory for attentional_propagation.1']
    #allocation13 [shape = 'u8[16384]{0}', space=vmem, size = 0x4000, scoped, tag = 'output window, operand 0, single buffered']
    %20 = vsyncpa [#allocation3], 0
    %21 = vsyncpa [#allocation6], 0
    %22 = vsyncpa [#allocation9], 0
    %23 = vsyncpa [#allocation12], 0
    %24 = vsyncpa [#allocation4], 0
    // Predicated region
    $region2: #{attentional_propagation.1} parent=1 // pred_check
      _
    $region3: #{attentional_propagation.1} parent=1 // pred_check_branch
      %26 = sbr.rel (0) target = $region5
    $region4: #{attentional_propagation.1} parent=1 // pred_region
      _
    $region5: #{attentional_propagation.1} parent=1 // pred_fallthru
      _
    // Predicated region
    $region6: #{attentional_propagation.1} parent=1 // pred_check
      _
    $region7: #{attentional_propagation.1} parent=1 // pred_check_branch
      %28 = sbr.rel (0) target = $region9
    $region8: #{attentional_propagation.1} parent=1 // pred_region
      _
    $region9: #{attentional_propagation.1} parent=1 // pred_fallthru
      _
    // Predicated region
    $region10: #{attentional_propagation.1} parent=1 // pred_check
      _
    $region11: #{attentional_propagation.1} parent=1 // pred_check_branch
      %30 = sbr.rel (0) target = $region13
    $region12: #{attentional_propagation.1} parent=1 // pred_region
      _
    $region13: #{attentional_propagation.1} parent=1 // pred_fallthru
      _
    // Predicated region
    $region14: #{attentional_propagation.1} parent=1 // pred_check
      _
    $region15: #{attentional_propagation.1} parent=1 // pred_check_branch
      %32 = sbr.rel (0) target = $region17
    $region16: #{attentional_propagation.1} parent=1 // pred_region
      _
    $region17: #{attentional_propagation.1} parent=1 // pred_fallthru
      _
    // Predicated region
    $region18: #{attentional_propagation.1} parent=1 // pred_check
      _
    $region19: #{attentional_propagation.1} parent=1 // pred_check_branch
      %34 = sbr.rel (0) target = $region21
    $region20: #{attentional_propagation.1} parent=1 // pred_region
      %36 = vsyncadd [#allocation3], 0
      %s37 = sshll.u32 %s4, 4
      %s38 = int_to_ptr.hbm [resolvable:$true] %s37
      %s39 = sshll.u32 [#allocation2], 4
      %s40 = int_to_ptr.vmem [resolvable:$true] %s39
      %45 = dma.hbm_to_vmem [thread:$0]  %s38, 512, %s40, [#allocation3], 128, 128, 8
    $region21: #{attentional_propagation.1} parent=1 // pred_fallthru
      _
    // Predicated region
    $region22: #{attentional_propagation.1} parent=1 // pred_check
      _
    $region23: #{attentional_propagation.1} parent=1 // pred_check_branch
      %47 = sbr.rel (0) target = $region25
    $region24: #{attentional_propagation.1} parent=1 // pred_region
      _
    $region25: #{attentional_propagation.1} parent=1 // pred_fallthru
      _
    // Predicated region
    $region26: #{attentional_propagation.1} parent=1 // pred_check
      _
    $region27: #{attentional_propagation.1} parent=1 // pred_check_branch
      %49 = sbr.rel (0) target = $region29
    $region28: #{attentional_propagation.1} parent=1 // pred_region
      %51 = vsyncadd [#allocation6], 0
      %s52 = sshll.u32 %s6, 4
      %s53 = int_to_ptr.hbm [resolvable:$true] %s52
      %s54 = sshll.u32 [#allocation5], 4
      %s55 = int_to_ptr.vmem [resolvable:$true] %s54
      %60 = dma.hbm_to_vmem [thread:$0]  %s53, 512, %s55, [#allocation6], 128, 128, 8
    $region29: #{attentional_propagation.1} parent=1 // pred_fallthru
      _
    // Predicated region
    $region30: #{attentional_propagation.1} parent=1 // pred_check
      _
    $region31: #{attentional_propagation.1} parent=1 // pred_check_branch
      %62 = sbr.rel (0) target = $region33
    $region32: #{attentional_propagation.1} parent=1 // pred_region
      _
    $region33: #{attentional_propagation.1} parent=1 // pred_fallthru
      _
    // Predicated region
    $region34: #{attentional_propagation.1} parent=1 // pred_check
      _
    $region35: #{attentional_propagation.1} parent=1 // pred_check_branch
      %64 = sbr.rel (0) target = $region37
    $region36: #{attentional_propagation.1} parent=1 // pred_region
      %66 = vsyncadd [#allocation6], 0
      %s67 = sshll.u32 %s8, 4
      %s68 = int_to_ptr.hbm [resolvable:$true] %s67
      %s69 = sshll.u32 [#allocation7], 4
      %s70 = int_to_ptr.vmem [resolvable:$true] %s69
      %75 = dma.hbm_to_vmem [thread:$0]  %s68, 512, %s70, [#allocation6], 128, 128, 8
    $region37: #{attentional_propagation.1} parent=1 // pred_fallthru
      _
    // Predicated region
    $region38: #{attentional_propagation.1} parent=1 // pred_check
      _
    $region39: #{attentional_propagation.1} parent=1 // pred_check_branch
      %77 = sbr.rel (0) target = $region41
    $region40: #{attentional_propagation.1} parent=1 // pred_region
      %79 = vsyncadd [#allocation9], 0
      %s80 = sshll.u32 %s9, 4
      %s81 = int_to_ptr.hbm [resolvable:$true] %s80
      %s82 = sshll.u32 [#allocation8], 4
      %s83 = int_to_ptr.vmem [resolvable:$true] %s82
      %88 = dma.hbm_to_vmem [thread:$0]  %s81, 512, %s83, [#allocation9], 128, 128, 8
    $region41: #{attentional_propagation.1} parent=1 // pred_fallthru
      _
    // Predicated region
    $region42: #{attentional_propagation.1} parent=1 // pred_check
      _
    $region43: #{attentional_propagation.1} parent=1 // pred_check_branch
      %90 = sbr.rel (0) target = $region45
    $region44: #{attentional_propagation.1} parent=1 // pred_region
      %92 = vsyncadd [#allocation9], 0
      %s94 = sshll.u32 %s10, 4
      %s95 = int_to_ptr.hbm [resolvable:$true] %s94
      %s96 = sshll.u32 [#allocation10], 4
      %s97 = int_to_ptr.vmem [resolvable:$true] %s96
      %99 = dma.hbm_to_vmem [thread:$0]  %s95, 16, %s97, [#allocation9]
    $region45: #{attentional_propagation.1} parent=1 // pred_fallthru
      _
    // Predicated region
    $region46: #{attentional_propagation.1} parent=1 // pred_check
      _
    $region47: #{attentional_propagation.1} parent=1 // pred_check_branch
      %101 = sbr.rel (0) target = $region49
    $region48: #{attentional_propagation.1} parent=1 // pred_region
      _
    $region49: #{attentional_propagation.1} parent=1 // pred_fallthru
      _
    // Predicated region
    $region50: #{attentional_propagation.1} parent=1 // pred_check
      _
    $region51: #{attentional_propagation.1} parent=1 // pred_check_branch
      %103 = sbr.rel (0) target = $region53
    $region52: #{attentional_propagation.1} parent=1 // pred_region
      _
    $region53: #{attentional_propagation.1} parent=1 // pred_fallthru
      _
    // Predicated region
    $region54: #{attentional_propagation.1} parent=1 // pred_check
      _
    $region55: #{attentional_propagation.1} parent=1 // pred_check_branch
      %105 = sbr.rel (0) target = $region57
    $region56: #{attentional_propagation.1} parent=1 // pred_region
      _
    $region57: #{attentional_propagation.1} parent=1 // pred_fallthru
      _
    // Predicated region
    $region58: #{attentional_propagation.1} parent=1 // pred_check
      _
    $region59: #{attentional_propagation.1} parent=1 // pred_check_branch
      %107 = sbr.rel (0) target = $region61
    $region60: #{attentional_propagation.1} parent=1 // pred_region
      %109 = vsyncadd [#allocation12], 0
      %s111 = sshll.u32 %s14, 4
      %s112 = int_to_ptr.hbm [resolvable:$true] %s111
      %s113 = sshll.u32 [#allocation11], 4
      %s114 = int_to_ptr.vmem [resolvable:$true] %s113
      %116 = dma.hbm_to_vmem [thread:$0]  %s112, 16, %s114, [#allocation12]
    $region61: #{attentional_propagation.1} parent=1 // pred_fallthru
      _
    // Predicated region
    $region62: #{attentional_propagation.1} parent=1 // pred_check
      _
    $region63: #{attentional_propagation.1} parent=1 // pred_check_branch
      %118 = sbr.rel (0) target = $region65
    $region64: #{attentional_propagation.1} parent=1 // pred_region
      %120 = dma.done [#allocation3], 512
    $region65: #{attentional_propagation.1} parent=1 // pred_fallthru
      _
    // Predicated region
    $region66: #{attentional_propagation.1} parent=1 // pred_check
      _
    $region67: #{attentional_propagation.1} parent=1 // pred_check_branch
      %122 = sbr.rel (0) target = $region69
    $region68: #{attentional_propagation.1} parent=1 // pred_region
      %124 = dma.done [#allocation6], 512
    $region69: #{attentional_propagation.1} parent=1 // pred_fallthru
      _
    // Predicated region
    $region70: #{attentional_propagation.1} parent=1 // pred_check
      _
    $region71: #{attentional_propagation.1} parent=1 // pred_check_branch
      %126 = sbr.rel (0) target = $region73
    $region72: #{attentional_propagation.1} parent=1 // pred_region
      %128 = dma.done [#allocation6], 512
    $region73: #{attentional_propagation.1} parent=1 // pred_fallthru
      _
    // Predicated region
    $region74: #{attentional_propagation.1} parent=1 // pred_check
      _
    $region75: #{attentional_propagation.1} parent=1 // pred_check_branch
      %130 = sbr.rel (0) target = $region77
    $region76: #{attentional_propagation.1} parent=1 // pred_region
      %132 = dma.done [#allocation9], 512
    $region77: #{attentional_propagation.1} parent=1 // pred_fallthru
      _
    // Predicated region
    $region78: #{attentional_propagation.1} parent=1 // pred_check
      _
    $region79: #{attentional_propagation.1} parent=1 // pred_check_branch
      %134 = sbr.rel (0) target = $region81
    $region80: #{attentional_propagation.1} parent=1 // pred_region
      %136 = dma.done [#allocation9], 16
    $region81: #{attentional_propagation.1} parent=1 // pred_fallthru
      _
    // Predicated region
    $region82: #{attentional_propagation.1} parent=1 // pred_check
      _
    $region83: #{attentional_propagation.1} parent=1 // pred_check_branch
      %138 = sbr.rel (0) target = $region85
    $region84: #{attentional_propagation.1} parent=1 // pred_region
      %140 = dma.done [#allocation12], 16
    $region85: #{attentional_propagation.1} parent=1 // pred_fallthru
      _
    %v141 = vld [vmem:[%s0] sm:$0xff]
    %v142 = vld [vmem:[%s0 + $0x8] sm:$0xff]
    %v143 = vld [vmem:[%s0 + $0x10] sm:$0xff]
    %v144 = vld [vmem:[%s0 + $0x18] sm:$0xff]
    %v145 = vld [vmem:[%s1] sm:$0xff]
    %v146 = vld [vmem:[%s1 + $0x8] sm:$0xff]
    %v147 = vld [vmem:[%s1 + $0x10] sm:$0xff]
    %v148 = vld [vmem:[%s1 + $0x18] sm:$0xff]
    %v149 = vld [vmem:[%s2] sm:$0xff]
    %v150 = vld [vmem:[%s2 + $0x8] sm:$0xff]
    %v151 = vld [vmem:[%s2 + $0x10] sm:$0xff]
    %v152 = vld [vmem:[%s2 + $0x18] sm:$0xff]
    %v153 = vld [vmem:[%s3] sm:$0x1]
    %v155 = vperm.slane %v153, 0
    %vm157 = vcmask 261120
    %v159 = vsel %vm157, %v141, 0
    %v162 = vsel %vm157, %v142, 0
    %v165 = vsel %vm157, %v143, 0
    %v168 = vsel %vm157, %v144, 0
    %170 = vmatpush.msra.mxu0 0.0
    %171 = vmatpush.msra.mxu0 0.0
    %172 = vmatpush.msra.mxu0 0.0
    %173 = vmatpush.msra.mxu0 0.0
    %174 = vmatpush.msra.mxu0 0.0
    %175 = vmatpush.msra.mxu0 0.0
    %176 = vmatpush.msra.mxu0 0.0
    %177 = vmatpush.msra.mxu0 0.0
    %178 = vmatpush.msra.mxu0 0.0
    %179 = vmatpush.msra.mxu0 0.0
    %180 = vmatpush.msra.mxu0 0.0
    %181 = vmatpush.msra.mxu0 0.0
    %182 = vmatpush.msra.mxu0 %v152
    %183 = vmatpush.msra.mxu0 %v151
    %184 = vmatpush.msra.mxu0 %v150
    %185 = vmatpush.msra.mxu0 %v149
    %186 = vmatmul.f32.gmra.mxu0 %v159
    %v187 = vpop.f32.mrf.mxu0
    %v188 = vadd.f32 %v155, %v187
    %189 = vmatmul.f32.gmra.mxu0 %v162
    %v190 = vpop.f32.mrf.mxu0
    %v191 = vadd.f32 %v155, %v190
    %192 = vmatmul.f32.gmra.mxu0 %v165
    %v193 = vpop.f32.mrf.mxu0
    %v194 = vadd.f32 %v155, %v193
    %195 = vmatmul.f32.gmra.mxu0 %v168
    %v196 = vpop.f32.mrf.mxu0
    %v197 = vadd.f32 %v155, %v196
    %198 = vdwg.mxu0
    %v199 = vld [vmem:[#allocation2] sm:$0xff]
    %v200 = vld [vmem:[#allocation2 + $0x8] sm:$0xff]
    %v201 = vld [vmem:[#allocation2 + $0x10] sm:$0xff]
    %v202 = vld [vmem:[#allocation2 + $0x18] sm:$0xff]
    %v203 = vld [vmem:[%s5] sm:$0x1]
    %v205 = vperm.slane %v203, 0
    %v208 = vsel %vm157, %v145, 0
    %v211 = vsel %vm157, %v146, 0
    %v214 = vsel %vm157, %v147, 0
    %v217 = vsel %vm157, %v148, 0
    %219 = vmatpush.msra.mxu0 0.0
    %220 = vmatpush.msra.mxu0 0.0
    %221 = vmatpush.msra.mxu0 0.0
    %222 = vmatpush.msra.mxu0 0.0
    %223 = vmatpush.msra.mxu0 0.0
    %224 = vmatpush.msra.mxu0 0.0
    %225 = vmatpush.msra.mxu0 0.0
    %226 = vmatpush.msra.mxu0 0.0
    %227 = vmatpush.msra.mxu0 0.0
    %228 = vmatpush.msra.mxu0 0.0
    %229 = vmatpush.msra.mxu0 0.0
    %230 = vmatpush.msra.mxu0 0.0
    %231 = vmatpush.msra.mxu0 %v202
    %232 = vmatpush.msra.mxu0 %v201
    %233 = vmatpush.msra.mxu0 %v200
    %234 = vmatpush.msra.mxu0 %v199
    %235 = vmatmul.f32.gmra.mxu0 %v208
    %v236 = vpop.f32.mrf.mxu0
    %v237 = vadd.f32 %v205, %v236
    %238 = vmatmul.f32.gmra.mxu0 %v211
    %v239 = vpop.f32.mrf.mxu0
    %v240 = vadd.f32 %v205, %v239
    %241 = vmatmul.f32.gmra.mxu0 %v214
    %v242 = vpop.f32.mrf.mxu0
    %v243 = vadd.f32 %v205, %v242
    %244 = vmatmul.f32.gmra.mxu0 %v217
    %v245 = vpop.f32.mrf.mxu0
    %v246 = vadd.f32 %v205, %v245
    %247 = vdwg.mxu0
    %vm248 = vcmask 64512
    %v250 = vsel %vm248, %v188, 0
    %v253 = vsel %vm248, %v191, 0
    %v256 = vsel %vm248, %v237, 0
    %v259 = vsel %vm248, %v240, 0
    %261 = vmatpush.xpose.msra.mxu0 0.0
    %262 = vmatpush.xpose.msra.mxu0 0.0
    %263 = vmatpush.xpose.msra.mxu0 0.0
    %264 = vmatpush.xpose.msra.mxu0 0.0
    %265 = vmatpush.xpose.msra.mxu0 0.0
    %266 = vmatpush.xpose.msra.mxu0 0.0
    %267 = vmatpush.xpose.msra.mxu0 0.0
    %268 = vmatpush.xpose.msra.mxu0 0.0
    %269 = vmatpush.xpose.msra.mxu0 0.0
    %270 = vmatpush.xpose.msra.mxu0 0.0
    %271 = vmatpush.xpose.msra.mxu0 0.0
    %272 = vmatpush.xpose.msra.mxu0 0.0
    %273 = vmatpush.xpose.msra.mxu0 0.0
    %274 = vmatpush.xpose.msra.mxu0 0.0
    %275 = vmatpush.xpose.msra.mxu0 %v259
    %276 = vmatpush.xpose.msra.mxu0 %v256
    %277 = vmatmul.f32.gmra.mxu0 %v250
    %v278 = vpop.f32.mrf.mxu0
    %v279 = vadd.f32 0.0, %v278
    %280 = vmatmul.f32.gmra.mxu0 %v253
    %v281 = vpop.f32.mrf.mxu0
    %v282 = vadd.f32 0.0, %v281
    %283 = vdwg.mxu0
    %v285 = vsel %vm248, %v194, 0
    %v288 = vsel %vm248, %v197, 0
    %v291 = vsel %vm248, %v243, 0
    %v294 = vsel %vm248, %v246, 0
    %296 = vmatpush.xpose.msra.mxu0 0.0
    %297 = vmatpush.xpose.msra.mxu0 0.0
    %298 = vmatpush.xpose.msra.mxu0 0.0
    %299 = vmatpush.xpose.msra.mxu0 0.0
    %300 = vmatpush.xpose.msra.mxu0 0.0
    %301 = vmatpush.xpose.msra.mxu0 0.0
    %302 = vmatpush.xpose.msra.mxu0 0.0
    %303 = vmatpush.xpose.msra.mxu0 0.0
    %304 = vmatpush.xpose.msra.mxu0 0.0
    %305 = vmatpush.xpose.msra.mxu0 0.0
    %306 = vmatpush.xpose.msra.mxu0 0.0
    %307 = vmatpush.xpose.msra.mxu0 0.0
    %308 = vmatpush.xpose.msra.mxu0 0.0
    %309 = vmatpush.xpose.msra.mxu0 0.0
    %310 = vmatpush.xpose.msra.mxu0 %v294
    %311 = vmatpush.xpose.msra.mxu0 %v291
    %312 = vmatmul.f32.gmra.mxu0 %v285
    %v313 = vpop.f32.mrf.mxu0
    %v314 = vadd.f32 0.0, %v313
    %315 = vmatmul.f32.gmra.mxu0 %v288
    %v316 = vpop.f32.mrf.mxu0
    %v317 = vadd.f32 0.0, %v316
    %318 = vdwg.mxu0
    %v319 = vmul.f32 %v279, 0.35355338
    %v320 = vmul.f32 %v282, 0.35355338
    %v321 = vmul.f32 %v314, 0.35355338
    %v322 = vmul.f32 %v317, 0.35355338
    %vm323 = vcmask 130048
    %v324 = vsel %vm323, %v319, -inf
    %325 = vmax.xlane.f32.xlu0 %v324
    %v326 = vpop.xlane.xlu0 %325
    %v327 = vsel %vm323, %v320, -inf
    %328 = vmax.xlane.f32.xlu0 %v327
    %v329 = vpop.xlane.xlu0 %328
    %v330 = vsel %vm323, %v321, -inf
    %331 = vmax.xlane.f32.xlu0 %v330
    %v332 = vpop.xlane.xlu0 %331
    %v333 = vsel %vm323, %v322, -inf
    %334 = vmax.xlane.f32.xlu0 %v333
    %v335 = vpop.xlane.xlu0 %334
    %v336 = vsub.f32 %v319, %v326
    %v337 = vsub.f32 %v320, %v329
    %v338 = vsub.f32 %v321, %v332
    %v339 = vsub.f32 %v322, %v335
    %v340 = vmul.f32 %v336, 1.442695
    %v341 = vpow.pop %v340
    %v342 = vmul.f32 %v337, 1.442695
    %v343 = vpow.pop %v342
    %v344 = vmul.f32 %v338, 1.442695
    %v345 = vpow.pop %v344
    %v346 = vmul.f32 %v339, 1.442695
    %v347 = vpow.pop %v346
    %v348 = vsel %vm323, %v341, 0.0
    %349 = vadd.xlane.f32.xlu0 %v348
    %v350 = vpop.xlane.xlu0 %349
    %v351 = vsel %vm323, %v343, 0.0
    %352 = vadd.xlane.f32.xlu0 %v351
    %v353 = vpop.xlane.xlu0 %352
    %v354 = vsel %vm323, %v345, 0.0
    %355 = vadd.xlane.f32.xlu0 %v354
    %v356 = vpop.xlane.xlu0 %355
    %v357 = vsel %vm323, %v347, 0.0
    %358 = vadd.xlane.f32.xlu0 %v357
    %v359 = vpop.xlane.xlu0 %358
    %v360 = vrcp.pop %v350
    %v361 = vrcp.pop %v353
    %v362 = vrcp.pop %v356
    %v363 = vrcp.pop %v359
    %v364 = vmul.f32 %v341, %v360
    %v365 = vmul.f32 %v343, %v361
    %v366 = vmul.f32 %v345, %v362
    %v367 = vmul.f32 %v347, %v363
    %368 = vrot.lane.b32.xlu0 %v237, 96
    %v369 = vpop.permute.xlu0 %368
    %370 = vrot.lane.b32.xlu0 %v240, 96
    %v371 = vpop.permute.xlu0 %370
    %v375 = vsel %vm323, %v364, 0
    %v378 = vsel %vm323, %v365, 0
    %380 = vmatpush.msra.mxu0 0.0
    %381 = vmatpush.msra.mxu0 0.0
    %382 = vmatpush.msra.mxu0 0.0
    %383 = vmatpush.msra.mxu0 0.0
    %384 = vmatpush.msra.mxu0 0.0
    %385 = vmatpush.msra.mxu0 0.0
    %386 = vmatpush.msra.mxu0 0.0
    %387 = vmatpush.msra.mxu0 0.0
    %388 = vmatpush.msra.mxu0 0.0
    %389 = vmatpush.msra.mxu0 0.0
    %390 = vmatpush.msra.mxu0 0.0
    %391 = vmatpush.msra.mxu0 0.0
    %392 = vmatpush.msra.mxu0 0.0
    %393 = vmatpush.msra.mxu0 0.0
    %394 = vmatpush.msra.mxu0 %v371
    %395 = vmatpush.msra.mxu0 %v369
    %396 = vmatmul.f32.gmra.mxu0 %v375
    %v397 = vpop.f32.mrf.mxu0
    %v398 = vadd.f32 0.0, %v397
    %399 = vmatmul.f32.gmra.mxu0 %v378
    %v400 = vpop.f32.mrf.mxu0
    %v401 = vadd.f32 0.0, %v400
    %402 = vdwg.mxu0
    %403 = vrot.lane.b32.xlu0 %v243, 96
    %v404 = vpop.permute.xlu0 %403
    %405 = vrot.lane.b32.xlu0 %v246, 96
    %v406 = vpop.permute.xlu0 %405
    %v410 = vsel %vm323, %v366, 0
    %v413 = vsel %vm323, %v367, 0
    %415 = vmatpush.msra.mxu0 0.0
    %416 = vmatpush.msra.mxu0 0.0
    %417 = vmatpush.msra.mxu0 0.0
    %418 = vmatpush.msra.mxu0 0.0
    %419 = vmatpush.msra.mxu0 0.0
    %420 = vmatpush.msra.mxu0 0.0
    %421 = vmatpush.msra.mxu0 0.0
    %422 = vmatpush.msra.mxu0 0.0
    %423 = vmatpush.msra.mxu0 0.0
    %424 = vmatpush.msra.mxu0 0.0
    %425 = vmatpush.msra.mxu0 0.0
    %426 = vmatpush.msra.mxu0 0.0
    %427 = vmatpush.msra.mxu0 0.0
    %428 = vmatpush.msra.mxu0 0.0
    %429 = vmatpush.msra.mxu0 %v406
    %430 = vmatpush.msra.mxu0 %v404
    %431 = vmatmul.f32.gmra.mxu0 %v410
    %v432 = vpop.f32.mrf.mxu0
    %v433 = vadd.f32 0.0, %v432
    %434 = vmatmul.f32.gmra.mxu0 %v413
    %v435 = vpop.f32.mrf.mxu0
    %v436 = vadd.f32 0.0, %v435
    %437 = vdwg.mxu0
    %438 = vrot.lane.b32.xlu0 %v188, 120
    %v439 = vpop.permute.xlu0 %438
    %440 = vrot.lane.b32.xlu0 %v191, 120
    %v441 = vpop.permute.xlu0 %440
    %442 = vrot.lane.b32.xlu0 %v237, 120
    %v443 = vpop.permute.xlu0 %442
    %444 = vrot.lane.b32.xlu0 %v240, 120
    %v445 = vpop.permute.xlu0 %444
    %v446 = vsel %vm248, %v439, 0
    %v448 = vsel %vm248, %v441, 0
    %v450 = vsel %vm248, %v443, 0
    %v452 = vsel %vm248, %v445, 0
    %454 = vmatpush.xpose.msra.mxu0 0.0
    %455 = vmatpush.xpose.msra.mxu0 0.0
    %456 = vmatpush.xpose.msra.mxu0 0.0
    %457 = vmatpush.xpose.msra.mxu0 0.0
    %458 = vmatpush.xpose.msra.mxu0 0.0
    %459 = vmatpush.xpose.msra.mxu0 0.0
    %460 = vmatpush.xpose.msra.mxu0 0.0
    %461 = vmatpush.xpose.msra.mxu0 0.0
    %462 = vmatpush.xpose.msra.mxu0 0.0
    %463 = vmatpush.xpose.msra.mxu0 0.0
    %464 = vmatpush.xpose.msra.mxu0 0.0
    %465 = vmatpush.xpose.msra.mxu0 0.0
    %466 = vmatpush.xpose.msra.mxu0 0.0
    %467 = vmatpush.xpose.msra.mxu0 0.0
    %468 = vmatpush.xpose.msra.mxu0 %v452
    %469 = vmatpush.xpose.msra.mxu0 %v450
    %470 = vmatmul.f32.gmra.mxu0 %v446
    %v471 = vpop.f32.mrf.mxu0
    %v472 = vadd.f32 0.0, %v471
    %473 = vmatmul.f32.gmra.mxu0 %v448
    %v474 = vpop.f32.mrf.mxu0
    %v475 = vadd.f32 0.0, %v474
    %476 = vdwg.mxu0
    %477 = vrot.lane.b32.xlu0 %v194, 120
    %v478 = vpop.permute.xlu0 %477
    %479 = vrot.lane.b32.xlu0 %v197, 120
    %v480 = vpop.permute.xlu0 %479
    %481 = vrot.lane.b32.xlu0 %v243, 120
    %v482 = vpop.permute.xlu0 %481
    %483 = vrot.lane.b32.xlu0 %v246, 120
    %v484 = vpop.permute.xlu0 %483
    %v485 = vsel %vm248, %v478, 0
    %v487 = vsel %vm248, %v480, 0
    %v489 = vsel %vm248, %v482, 0
    %v491 = vsel %vm248, %v484, 0
    %493 = vmatpush.xpose.msra.mxu0 0.0
    %494 = vmatpush.xpose.msra.mxu0 0.0
    %495 = vmatpush.xpose.msra.mxu0 0.0
    %496 = vmatpush.xpose.msra.mxu0 0.0
    %497 = vmatpush.xpose.msra.mxu0 0.0
    %498 = vmatpush.xpose.msra.mxu0 0.0
    %499 = vmatpush.xpose.msra.mxu0 0.0
    %500 = vmatpush.xpose.msra.mxu0 0.0
    %501 = vmatpush.xpose.msra.mxu0 0.0
    %502 = vmatpush.xpose.msra.mxu0 0.0
    %503 = vmatpush.xpose.msra.mxu0 0.0
    %504 = vmatpush.xpose.msra.mxu0 0.0
    %505 = vmatpush.xpose.msra.mxu0 0.0
    %506 = vmatpush.xpose.msra.mxu0 0.0
    %507 = vmatpush.xpose.msra.mxu0 %v491
    %508 = vmatpush.xpose.msra.mxu0 %v489
    %509 = vmatmul.f32.gmra.mxu0 %v485
    %v510 = vpop.f32.mrf.mxu0
    %v511 = vadd.f32 0.0, %v510
    %512 = vmatmul.f32.gmra.mxu0 %v487
    %v513 = vpop.f32.mrf.mxu0
    %v514 = vadd.f32 0.0, %v513
    %515 = vdwg.mxu0
    %v516 = vmul.f32 %v472, 0.35355338
    %v517 = vmul.f32 %v475, 0.35355338
    %v518 = vmul.f32 %v511, 0.35355338
    %v519 = vmul.f32 %v514, 0.35355338
    %v520 = vsel %vm323, %v516, -inf
    %521 = vmax.xlane.f32.xlu0 %v520
    %v522 = vpop.xlane.xlu0 %521
    %v523 = vsel %vm323, %v517, -inf
    %524 = vmax.xlane.f32.xlu0 %v523
    %v525 = vpop.xlane.xlu0 %524
    %v526 = vsel %vm323, %v518, -inf
    %527 = vmax.xlane.f32.xlu0 %v526
    %v528 = vpop.xlane.xlu0 %527
    %v529 = vsel %vm323, %v519, -inf
    %530 = vmax.xlane.f32.xlu0 %v529
    %v531 = vpop.xlane.xlu0 %530
    %v532 = vsub.f32 %v516, %v522
    %v533 = vsub.f32 %v517, %v525
    %v534 = vsub.f32 %v518, %v528
    %v535 = vsub.f32 %v519, %v531
    %v536 = vmul.f32 %v532, 1.442695
    %v537 = vpow.pop %v536
    %v538 = vmul.f32 %v533, 1.442695
    %v539 = vpow.pop %v538
    %v540 = vmul.f32 %v534, 1.442695
    %v541 = vpow.pop %v540
    %v542 = vmul.f32 %v535, 1.442695
    %v543 = vpow.pop %v542
    %v544 = vsel %vm323, %v537, 0.0
    %545 = vadd.xlane.f32.xlu0 %v544
    %v546 = vpop.xlane.xlu0 %545
    %v547 = vsel %vm323, %v539, 0.0
    %548 = vadd.xlane.f32.xlu0 %v547
    %v549 = vpop.xlane.xlu0 %548
    %v550 = vsel %vm323, %v541, 0.0
    %551 = vadd.xlane.f32.xlu0 %v550
    %v552 = vpop.xlane.xlu0 %551
    %v553 = vsel %vm323, %v543, 0.0
    %554 = vadd.xlane.f32.xlu0 %v553
    %v555 = vpop.xlane.xlu0 %554
    %v556 = vrcp.pop %v546
    %v557 = vrcp.pop %v549
    %v558 = vrcp.pop %v552
    %v559 = vrcp.pop %v555
    %v560 = vmul.f32 %v537, %v556
    %v561 = vmul.f32 %v539, %v557
    %v562 = vmul.f32 %v541, %v558
    %v563 = vmul.f32 %v543, %v559
    %564 = vrot.lane.b32.xlu0 %v237, 88
    %v565 = vpop.permute.xlu0 %564
    %566 = vrot.lane.b32.xlu0 %v240, 88
    %v567 = vpop.permute.xlu0 %566
    %v571 = vsel %vm323, %v560, 0
    %v574 = vsel %vm323, %v561, 0
    %576 = vmatpush.msra.mxu0 0.0
    %577 = vmatpush.msra.mxu0 0.0
    %578 = vmatpush.msra.mxu0 0.0
    %579 = vmatpush.msra.mxu0 0.0
    %580 = vmatpush.msra.mxu0 0.0
    %581 = vmatpush.msra.mxu0 0.0
    %582 = vmatpush.msra.mxu0 0.0
    %583 = vmatpush.msra.mxu0 0.0
    %584 = vmatpush.msra.mxu0 0.0
    %585 = vmatpush.msra.mxu0 0.0
    %586 = vmatpush.msra.mxu0 0.0
    %587 = vmatpush.msra.mxu0 0.0
    %588 = vmatpush.msra.mxu0 0.0
    %589 = vmatpush.msra.mxu0 0.0
    %590 = vmatpush.msra.mxu0 %v567
    %591 = vmatpush.msra.mxu0 %v565
    %592 = vmatmul.f32.gmra.mxu0 %v571
    %v593 = vpop.f32.mrf.mxu0
    %v594 = vadd.f32 0.0, %v593
    %595 = vmatmul.f32.gmra.mxu0 %v574
    %v596 = vpop.f32.mrf.mxu0
    %v597 = vadd.f32 0.0, %v596
    %598 = vdwg.mxu0
    %599 = vrot.lane.b32.xlu0 %v243, 88
    %v600 = vpop.permute.xlu0 %599
    %601 = vrot.lane.b32.xlu0 %v246, 88
    %v602 = vpop.permute.xlu0 %601
    %v606 = vsel %vm323, %v562, 0
    %v609 = vsel %vm323, %v563, 0
    %611 = vmatpush.msra.mxu0 0.0
    %612 = vmatpush.msra.mxu0 0.0
    %613 = vmatpush.msra.mxu0 0.0
    %614 = vmatpush.msra.mxu0 0.0
    %615 = vmatpush.msra.mxu0 0.0
    %616 = vmatpush.msra.mxu0 0.0
    %617 = vmatpush.msra.mxu0 0.0
    %618 = vmatpush.msra.mxu0 0.0
    %619 = vmatpush.msra.mxu0 0.0
    %620 = vmatpush.msra.mxu0 0.0
    %621 = vmatpush.msra.mxu0 0.0
    %622 = vmatpush.msra.mxu0 0.0
    %623 = vmatpush.msra.mxu0 0.0
    %624 = vmatpush.msra.mxu0 0.0
    %625 = vmatpush.msra.mxu0 %v602
    %626 = vmatpush.msra.mxu0 %v600
    %627 = vmatmul.f32.gmra.mxu0 %v606
    %v628 = vpop.f32.mrf.mxu0
    %v629 = vadd.f32 0.0, %v628
    %630 = vmatmul.f32.gmra.mxu0 %v609
    %v631 = vpop.f32.mrf.mxu0
    %v632 = vadd.f32 0.0, %v631
    %633 = vdwg.mxu0
    %634 = vrot.lane.b32.xlu0 %v188, 112
    %v635 = vpop.permute.xlu0 %634
    %636 = vrot.lane.b32.xlu0 %v191, 112
    %v637 = vpop.permute.xlu0 %636
    %638 = vrot.lane.b32.xlu0 %v237, 112
    %v639 = vpop.permute.xlu0 %638
    %640 = vrot.lane.b32.xlu0 %v240, 112
    %v641 = vpop.permute.xlu0 %640
    %v642 = vsel %vm248, %v635, 0
    %v644 = vsel %vm248, %v637, 0
    %v646 = vsel %vm248, %v639, 0
    %v648 = vsel %vm248, %v641, 0
    %650 = vmatpush.xpose.msra.mxu0 0.0
    %651 = vmatpush.xpose.msra.mxu0 0.0
    %652 = vmatpush.xpose.msra.mxu0 0.0
    %653 = vmatpush.xpose.msra.mxu0 0.0
    %654 = vmatpush.xpose.msra.mxu0 0.0
    %655 = vmatpush.xpose.msra.mxu0 0.0
    %656 = vmatpush.xpose.msra.mxu0 0.0
    %657 = vmatpush.xpose.msra.mxu0 0.0
    %658 = vmatpush.xpose.msra.mxu0 0.0
    %659 = vmatpush.xpose.msra.mxu0 0.0
    %660 = vmatpush.xpose.msra.mxu0 0.0
    %661 = vmatpush.xpose.msra.mxu0 0.0
    %662 = vmatpush.xpose.msra.mxu0 0.0
    %663 = vmatpush.xpose.msra.mxu0 0.0
    %664 = vmatpush.xpose.msra.mxu0 %v648
    %665 = vmatpush.xpose.msra.mxu0 %v646
    %666 = vmatmul.f32.gmra.mxu0 %v642
    %v667 = vpop.f32.mrf.mxu0
    %v668 = vadd.f32 0.0, %v667
    %669 = vmatmul.f32.gmra.mxu0 %v644
    %v670 = vpop.f32.mrf.mxu0
    %v671 = vadd.f32 0.0, %v670
    %672 = vdwg.mxu0
    %673 = vrot.lane.b32.xlu0 %v194, 112
    %v674 = vpop.permute.xlu0 %673
    %675 = vrot.lane.b32.xlu0 %v197, 112
    %v676 = vpop.permute.xlu0 %675
    %677 = vrot.lane.b32.xlu0 %v243, 112
    %v678 = vpop.permute.xlu0 %677
    %679 = vrot.lane.b32.xlu0 %v246, 112
    %v680 = vpop.permute.xlu0 %679
    %v681 = vsel %vm248, %v674, 0
    %v683 = vsel %vm248, %v676, 0
    %v685 = vsel %vm248, %v678, 0
    %v687 = vsel %vm248, %v680, 0
    %689 = vmatpush.xpose.msra.mxu0 0.0
    %690 = vmatpush.xpose.msra.mxu0 0.0
    %691 = vmatpush.xpose.msra.mxu0 0.0
    %692 = vmatpush.xpose.msra.mxu0 0.0
    %693 = vmatpush.xpose.msra.mxu0 0.0
    %694 = vmatpush.xpose.msra.mxu0 0.0
    %695 = vmatpush.xpose.msra.mxu0 0.0
    %696 = vmatpush.xpose.msra.mxu0 0.0
    %697 = vmatpush.xpose.msra.mxu0 0.0
    %698 = vmatpush.xpose.msra.mxu0 0.0
    %699 = vmatpush.xpose.msra.mxu0 0.0
    %700 = vmatpush.xpose.msra.mxu0 0.0
    %701 = vmatpush.xpose.msra.mxu0 0.0
    %702 = vmatpush.xpose.msra.mxu0 0.0
    %703 = vmatpush.xpose.msra.mxu0 %v687
    %704 = vmatpush.xpose.msra.mxu0 %v685
    %705 = vmatmul.f32.gmra.mxu0 %v681
    %v706 = vpop.f32.mrf.mxu0
    %v707 = vadd.f32 0.0, %v706
    %708 = vmatmul.f32.gmra.mxu0 %v683
    %v709 = vpop.f32.mrf.mxu0
    %v710 = vadd.f32 0.0, %v709
    %711 = vdwg.mxu0
    %v712 = vmul.f32 %v668, 0.35355338
    %v713 = vmul.f32 %v671, 0.35355338
    %v714 = vmul.f32 %v707, 0.35355338
    %v715 = vmul.f32 %v710, 0.35355338
    %v716 = vsel %vm323, %v712, -inf
    %717 = vmax.xlane.f32.xlu0 %v716
    %v718 = vpop.xlane.xlu0 %717
    %v719 = vsel %vm323, %v713, -inf
    %720 = vmax.xlane.f32.xlu0 %v719
    %v721 = vpop.xlane.xlu0 %720
    %v722 = vsel %vm323, %v714, -inf
    %723 = vmax.xlane.f32.xlu0 %v722
    %v724 = vpop.xlane.xlu0 %723
    %v725 = vsel %vm323, %v715, -inf
    %726 = vmax.xlane.f32.xlu0 %v725
    %v727 = vpop.xlane.xlu0 %726
    %v728 = vsub.f32 %v712, %v718
    %v729 = vsub.f32 %v713, %v721
    %v730 = vsub.f32 %v714, %v724
    %v731 = vsub.f32 %v715, %v727
    %v732 = vmul.f32 %v728, 1.442695
    %v733 = vpow.pop %v732
    %v734 = vmul.f32 %v729, 1.442695
    %v735 = vpow.pop %v734
    %v736 = vmul.f32 %v730, 1.442695
    %v737 = vpow.pop %v736
    %v738 = vmul.f32 %v731, 1.442695
    %v739 = vpow.pop %v738
    %v740 = vsel %vm323, %v733, 0.0
    %741 = vadd.xlane.f32.xlu0 %v740
    %v742 = vpop.xlane.xlu0 %741
    %v743 = vsel %vm323, %v735, 0.0
    %744 = vadd.xlane.f32.xlu0 %v743
    %v745 = vpop.xlane.xlu0 %744
    %v746 = vsel %vm323, %v737, 0.0
    %747 = vadd.xlane.f32.xlu0 %v746
    %v748 = vpop.xlane.xlu0 %747
    %v749 = vsel %vm323, %v739, 0.0
    %750 = vadd.xlane.f32.xlu0 %v749
    %v751 = vpop.xlane.xlu0 %750
    %v752 = vrcp.pop %v742
    %v753 = vrcp.pop %v745
    %v754 = vrcp.pop %v748
    %v755 = vrcp.pop %v751
    %v756 = vmul.f32 %v733, %v752
    %v757 = vmul.f32 %v735, %v753
    %v758 = vmul.f32 %v737, %v754
    %v759 = vmul.f32 %v739, %v755
    %760 = vrot.lane.b32.xlu0 %v237, 80
    %v761 = vpop.permute.xlu0 %760
    %762 = vrot.lane.b32.xlu0 %v240, 80
    %v763 = vpop.permute.xlu0 %762
    %v767 = vsel %vm323, %v756, 0
    %v770 = vsel %vm323, %v757, 0
    %772 = vmatpush.msra.mxu0 0.0
    %773 = vmatpush.msra.mxu0 0.0
    %774 = vmatpush.msra.mxu0 0.0
    %775 = vmatpush.msra.mxu0 0.0
    %776 = vmatpush.msra.mxu0 0.0
    %777 = vmatpush.msra.mxu0 0.0
    %778 = vmatpush.msra.mxu0 0.0
    %779 = vmatpush.msra.mxu0 0.0
    %780 = vmatpush.msra.mxu0 0.0
    %781 = vmatpush.msra.mxu0 0.0
    %782 = vmatpush.msra.mxu0 0.0
    %783 = vmatpush.msra.mxu0 0.0
    %784 = vmatpush.msra.mxu0 0.0
    %785 = vmatpush.msra.mxu0 0.0
    %786 = vmatpush.msra.mxu0 %v763
    %787 = vmatpush.msra.mxu0 %v761
    %788 = vmatmul.f32.gmra.mxu0 %v767
    %v789 = vpop.f32.mrf.mxu0
    %v790 = vadd.f32 0.0, %v789
    %791 = vmatmul.f32.gmra.mxu0 %v770
    %v792 = vpop.f32.mrf.mxu0
    %v793 = vadd.f32 0.0, %v792
    %794 = vdwg.mxu0
    %795 = vrot.lane.b32.xlu0 %v243, 80
    %v796 = vpop.permute.xlu0 %795
    %797 = vrot.lane.b32.xlu0 %v246, 80
    %v798 = vpop.permute.xlu0 %797
    %v802 = vsel %vm323, %v758, 0
    %v805 = vsel %vm323, %v759, 0
    %807 = vmatpush.msra.mxu0 0.0
    %808 = vmatpush.msra.mxu0 0.0
    %809 = vmatpush.msra.mxu0 0.0
    %810 = vmatpush.msra.mxu0 0.0
    %811 = vmatpush.msra.mxu0 0.0
    %812 = vmatpush.msra.mxu0 0.0
    %813 = vmatpush.msra.mxu0 0.0
    %814 = vmatpush.msra.mxu0 0.0
    %815 = vmatpush.msra.mxu0 0.0
    %816 = vmatpush.msra.mxu0 0.0
    %817 = vmatpush.msra.mxu0 0.0
    %818 = vmatpush.msra.mxu0 0.0
    %819 = vmatpush.msra.mxu0 0.0
    %820 = vmatpush.msra.mxu0 0.0
    %821 = vmatpush.msra.mxu0 %v798
    %822 = vmatpush.msra.mxu0 %v796
    %823 = vmatmul.f32.gmra.mxu0 %v802
    %v824 = vpop.f32.mrf.mxu0
    %v825 = vadd.f32 0.0, %v824
    %826 = vmatmul.f32.gmra.mxu0 %v805
    %v827 = vpop.f32.mrf.mxu0
    %v828 = vadd.f32 0.0, %v827
    %829 = vdwg.mxu0
    %830 = vrot.lane.b32.xlu0 %v188, 104
    %v831 = vpop.permute.xlu0 %830
    %832 = vrot.lane.b32.xlu0 %v191, 104
    %v833 = vpop.permute.xlu0 %832
    %834 = vrot.lane.b32.xlu0 %v237, 104
    %v835 = vpop.permute.xlu0 %834
    %836 = vrot.lane.b32.xlu0 %v240, 104
    %v837 = vpop.permute.xlu0 %836
    %v838 = vsel %vm248, %v831, 0
    %v840 = vsel %vm248, %v833, 0
    %v842 = vsel %vm248, %v835, 0
    %v844 = vsel %vm248, %v837, 0
    %846 = vmatpush.xpose.msra.mxu0 0.0
    %847 = vmatpush.xpose.msra.mxu0 0.0
    %848 = vmatpush.xpose.msra.mxu0 0.0
    %849 = vmatpush.xpose.msra.mxu0 0.0
    %850 = vmatpush.xpose.msra.mxu0 0.0
    %851 = vmatpush.xpose.msra.mxu0 0.0
    %852 = vmatpush.xpose.msra.mxu0 0.0
    %853 = vmatpush.xpose.msra.mxu0 0.0
    %854 = vmatpush.xpose.msra.mxu0 0.0
    %855 = vmatpush.xpose.msra.mxu0 0.0
    %856 = vmatpush.xpose.msra.mxu0 0.0
    %857 = vmatpush.xpose.msra.mxu0 0.0
    %858 = vmatpush.xpose.msra.mxu0 0.0
    %859 = vmatpush.xpose.msra.mxu0 0.0
    %860 = vmatpush.xpose.msra.mxu0 %v844
    %861 = vmatpush.xpose.msra.mxu0 %v842
    %862 = vmatmul.f32.gmra.mxu0 %v838
    %v863 = vpop.f32.mrf.mxu0
    %v864 = vadd.f32 0.0, %v863
    %865 = vmatmul.f32.gmra.mxu0 %v840
    %v866 = vpop.f32.mrf.mxu0
    %v867 = vadd.f32 0.0, %v866
    %868 = vdwg.mxu0
    %869 = vrot.lane.b32.xlu0 %v194, 104
    %v870 = vpop.permute.xlu0 %869
    %871 = vrot.lane.b32.xlu0 %v197, 104
    %v872 = vpop.permute.xlu0 %871
    %873 = vrot.lane.b32.xlu0 %v243, 104
    %v874 = vpop.permute.xlu0 %873
    %875 = vrot.lane.b32.xlu0 %v246, 104
    %v876 = vpop.permute.xlu0 %875
    %v877 = vsel %vm248, %v870, 0
    %v879 = vsel %vm248, %v872, 0
    %v881 = vsel %vm248, %v874, 0
    %v883 = vsel %vm248, %v876, 0
    %885 = vmatpush.xpose.msra.mxu0 0.0
    %886 = vmatpush.xpose.msra.mxu0 0.0
    %887 = vmatpush.xpose.msra.mxu0 0.0
    %888 = vmatpush.xpose.msra.mxu0 0.0
    %889 = vmatpush.xpose.msra.mxu0 0.0
    %890 = vmatpush.xpose.msra.mxu0 0.0
    %891 = vmatpush.xpose.msra.mxu0 0.0
    %892 = vmatpush.xpose.msra.mxu0 0.0
    %893 = vmatpush.xpose.msra.mxu0 0.0
    %894 = vmatpush.xpose.msra.mxu0 0.0
    %895 = vmatpush.xpose.msra.mxu0 0.0
    %896 = vmatpush.xpose.msra.mxu0 0.0
    %897 = vmatpush.xpose.msra.mxu0 0.0
    %898 = vmatpush.xpose.msra.mxu0 0.0
    %899 = vmatpush.xpose.msra.mxu0 %v883
    %900 = vmatpush.xpose.msra.mxu0 %v881
    %901 = vmatmul.f32.gmra.mxu0 %v877
    %v902 = vpop.f32.mrf.mxu0
    %v903 = vadd.f32 0.0, %v902
    %904 = vmatmul.f32.gmra.mxu0 %v879
    %v905 = vpop.f32.mrf.mxu0
    %v906 = vadd.f32 0.0, %v905
    %907 = vdwg.mxu0
    %v908 = vmul.f32 %v864, 0.35355338
    %v909 = vmul.f32 %v867, 0.35355338
    %v910 = vmul.f32 %v903, 0.35355338
    %v911 = vmul.f32 %v906, 0.35355338
    %v912 = vsel %vm323, %v908, -inf
    %913 = vmax.xlane.f32.xlu0 %v912
    %v914 = vpop.xlane.xlu0 %913
    %v915 = vsel %vm323, %v909, -inf
    %916 = vmax.xlane.f32.xlu0 %v915
    %v917 = vpop.xlane.xlu0 %916
    %v918 = vsel %vm323, %v910, -inf
    %919 = vmax.xlane.f32.xlu0 %v918
    %v920 = vpop.xlane.xlu0 %919
    %v921 = vsel %vm323, %v911, -inf
    %922 = vmax.xlane.f32.xlu0 %v921
    %v923 = vpop.xlane.xlu0 %922
    %v924 = vsub.f32 %v908, %v914
    %v925 = vsub.f32 %v909, %v917
    %v926 = vsub.f32 %v910, %v920
    %v927 = vsub.f32 %v911, %v923
    %v928 = vmul.f32 %v924, 1.442695
    %v929 = vpow.pop %v928
    %v930 = vmul.f32 %v925, 1.442695
    %v931 = vpow.pop %v930
    %v932 = vmul.f32 %v926, 1.442695
    %v933 = vpow.pop %v932
    %v934 = vmul.f32 %v927, 1.442695
    %v935 = vpow.pop %v934
    %v936 = vsel %vm323, %v929, 0.0
    %937 = vadd.xlane.f32.xlu0 %v936
    %v938 = vpop.xlane.xlu0 %937
    %v939 = vsel %vm323, %v931, 0.0
    %940 = vadd.xlane.f32.xlu0 %v939
    %v941 = vpop.xlane.xlu0 %940
    %v942 = vsel %vm323, %v933, 0.0
    %943 = vadd.xlane.f32.xlu0 %v942
    %v944 = vpop.xlane.xlu0 %943
    %v945 = vsel %vm323, %v935, 0.0
    %946 = vadd.xlane.f32.xlu0 %v945
    %v947 = vpop.xlane.xlu0 %946
    %v948 = vrcp.pop %v938
    %v949 = vrcp.pop %v941
    %v950 = vrcp.pop %v944
    %v951 = vrcp.pop %v947
    %v952 = vmul.f32 %v929, %v948
    %v953 = vmul.f32 %v931, %v949
    %v954 = vmul.f32 %v933, %v950
    %v955 = vmul.f32 %v935, %v951
    %956 = vrot.lane.b32.xlu0 %v237, 72
    %v957 = vpop.permute.xlu0 %956
    %958 = vrot.lane.b32.xlu0 %v240, 72
    %v959 = vpop.permute.xlu0 %958
    %v963 = vsel %vm323, %v952, 0
    %v966 = vsel %vm323, %v953, 0
    %968 = vmatpush.msra.mxu0 0.0
    %969 = vmatpush.msra.mxu0 0.0
    %970 = vmatpush.msra.mxu0 0.0
    %971 = vmatpush.msra.mxu0 0.0
    %972 = vmatpush.msra.mxu0 0.0
    %973 = vmatpush.msra.mxu0 0.0
    %974 = vmatpush.msra.mxu0 0.0
    %975 = vmatpush.msra.mxu0 0.0
    %976 = vmatpush.msra.mxu0 0.0
    %977 = vmatpush.msra.mxu0 0.0
    %978 = vmatpush.msra.mxu0 0.0
    %979 = vmatpush.msra.mxu0 0.0
    %980 = vmatpush.msra.mxu0 0.0
    %981 = vmatpush.msra.mxu0 0.0
    %982 = vmatpush.msra.mxu0 %v959
    %983 = vmatpush.msra.mxu0 %v957
    %984 = vmatmul.f32.gmra.mxu0 %v963
    %v985 = vpop.f32.mrf.mxu0
    %v986 = vadd.f32 0.0, %v985
    %987 = vmatmul.f32.gmra.mxu0 %v966
    %v988 = vpop.f32.mrf.mxu0
    %v989 = vadd.f32 0.0, %v988
    %990 = vdwg.mxu0
    %991 = vrot.lane.b32.xlu0 %v243, 72
    %v992 = vpop.permute.xlu0 %991
    %993 = vrot.lane.b32.xlu0 %v246, 72
    %v994 = vpop.permute.xlu0 %993
    %v998 = vsel %vm323, %v954, 0
    %v1001 = vsel %vm323, %v955, 0
    %1003 = vmatpush.msra.mxu0 0.0
    %1004 = vmatpush.msra.mxu0 0.0
    %1005 = vmatpush.msra.mxu0 0.0
    %1006 = vmatpush.msra.mxu0 0.0
    %1007 = vmatpush.msra.mxu0 0.0
    %1008 = vmatpush.msra.mxu0 0.0
    %1009 = vmatpush.msra.mxu0 0.0
    %1010 = vmatpush.msra.mxu0 0.0
    %1011 = vmatpush.msra.mxu0 0.0
    %1012 = vmatpush.msra.mxu0 0.0
    %1013 = vmatpush.msra.mxu0 0.0
    %1014 = vmatpush.msra.mxu0 0.0
    %1015 = vmatpush.msra.mxu0 0.0
    %1016 = vmatpush.msra.mxu0 0.0
    %1017 = vmatpush.msra.mxu0 %v994
    %1018 = vmatpush.msra.mxu0 %v992
    %1019 = vmatmul.f32.gmra.mxu0 %v998
    %v1020 = vpop.f32.mrf.mxu0
    %v1021 = vadd.f32 0.0, %v1020
    %1022 = vmatmul.f32.gmra.mxu0 %v1001
    %v1023 = vpop.f32.mrf.mxu0
    %v1024 = vadd.f32 0.0, %v1023
    %1025 = vdwg.mxu0
    %1030 = vrot.lane.b32.xlu0 %v594, 8
    %v1031 = vpop.permute.xlu0 %1030
    %1032 = vrot.lane.b32.xlu0 %v597, 8
    %v1033 = vpop.permute.xlu0 %1032
    %1034 = vrot.lane.b32.xlu0 %v629, 8
    %v1035 = vpop.permute.xlu0 %1034
    %1036 = vrot.lane.b32.xlu0 %v632, 8
    %v1037 = vpop.permute.xlu0 %1036
    %1046 = vrot.lane.b32.xlu0 %v790, 16
    %v1047 = vpop.permute.xlu0 %1046
    %1048 = vrot.lane.b32.xlu0 %v793, 16
    %v1049 = vpop.permute.xlu0 %1048
    %1050 = vrot.lane.b32.xlu0 %v825, 16
    %v1051 = vpop.permute.xlu0 %1050
    %1052 = vrot.lane.b32.xlu0 %v828, 16
    %v1053 = vpop.permute.xlu0 %1052
    %1062 = vrot.lane.b32.xlu0 %v986, 24
    %v1063 = vpop.permute.xlu0 %1062
    %1064 = vrot.lane.b32.xlu0 %v989, 24
    %v1065 = vpop.permute.xlu0 %1064
    %1066 = vrot.lane.b32.xlu0 %v1021, 24
    %v1067 = vpop.permute.xlu0 %1066
    %1068 = vrot.lane.b32.xlu0 %v1024, 24
    %v1069 = vpop.permute.xlu0 %1068
    %v1074 = vsel %vm248, %v398, %v1031
    %v1075 = vsel %vm248, %v401, %v1033
    %v1076 = vsel %vm248, %v433, %v1035
    %v1077 = vsel %vm248, %v436, %v1037
    %v1078 = vsel %vm323, %v1074, %v1047
    %v1079 = vsel %vm323, %v1075, %v1049
    %v1080 = vsel %vm323, %v1076, %v1051
    %v1081 = vsel %vm323, %v1077, %v1053
    %vm1082 = vcmask 195584
    %v1083 = vsel %vm1082, %v1078, %v1063
    %v1084 = vsel %vm1082, %v1079, %v1065
    %v1085 = vsel %vm1082, %v1080, %v1067
    %v1086 = vsel %vm1082, %v1081, %v1069
    %v1087 = vld [vmem:[#allocation5] sm:$0xff]
    %v1088 = vld [vmem:[#allocation5 + $0x8] sm:$0xff]
    %v1089 = vld [vmem:[#allocation5 + $0x10] sm:$0xff]
    %v1090 = vld [vmem:[#allocation5 + $0x18] sm:$0xff]
    %v1091 = vld [vmem:[%s7] sm:$0x1]
    %v1093 = vperm.slane %v1091, 0
    %v1096 = vsel %vm157, %v1083, 0
    %v1099 = vsel %vm157, %v1084, 0
    %v1102 = vsel %vm157, %v1085, 0
    %v1105 = vsel %vm157, %v1086, 0
    %1107 = vmatpush.msra.mxu0 0.0
    %1108 = vmatpush.msra.mxu0 0.0
    %1109 = vmatpush.msra.mxu0 0.0
    %1110 = vmatpush.msra.mxu0 0.0
    %1111 = vmatpush.msra.mxu0 0.0
    %1112 = vmatpush.msra.mxu0 0.0
    %1113 = vmatpush.msra.mxu0 0.0
    %1114 = vmatpush.msra.mxu0 0.0
    %1115 = vmatpush.msra.mxu0 0.0
    %1116 = vmatpush.msra.mxu0 0.0
    %1117 = vmatpush.msra.mxu0 0.0
    %1118 = vmatpush.msra.mxu0 0.0
    %1119 = vmatpush.msra.mxu0 %v1090
    %1120 = vmatpush.msra.mxu0 %v1089
    %1121 = vmatpush.msra.mxu0 %v1088
    %1122 = vmatpush.msra.mxu0 %v1087
    %1123 = vmatmul.f32.gmra.mxu0 %v1096
    %v1124 = vpop.f32.mrf.mxu0
    %v1125 = vadd.f32 %v1093, %v1124
    %1126 = vmatmul.f32.gmra.mxu0 %v1099
    %v1127 = vpop.f32.mrf.mxu0
    %v1128 = vadd.f32 %v1093, %v1127
    %1129 = vmatmul.f32.gmra.mxu0 %v1102
    %v1130 = vpop.f32.mrf.mxu0
    %v1131 = vadd.f32 %v1093, %v1130
    %1132 = vmatmul.f32.gmra.mxu0 %v1105
    %v1133 = vpop.f32.mrf.mxu0
    %v1134 = vadd.f32 %v1093, %v1133
    %1135 = vdwg.mxu0
    %v1136 = vld [vmem:[#allocation7] sm:$0xff]
    %v1137 = vld [vmem:[#allocation7 + $0x8] sm:$0xff]
    %v1138 = vld [vmem:[#allocation7 + $0x10] sm:$0xff]
    %v1139 = vld [vmem:[#allocation7 + $0x18] sm:$0xff]
    %v1140 = vld [vmem:[#allocation8] sm:$0xff]
    %v1141 = vld [vmem:[#allocation8 + $0x8] sm:$0xff]
    %v1142 = vld [vmem:[#allocation8 + $0x10] sm:$0xff]
    %v1143 = vld [vmem:[#allocation8 + $0x18] sm:$0xff]
    %v1145 = vsel %vm157, %v1125, 0
    %v1148 = vsel %vm157, %v1128, 0
    %v1151 = vsel %vm157, %v1131, 0
    %v1154 = vsel %vm157, %v1134, 0
    %1156 = vmatpush.msra.mxu0 0.0
    %1157 = vmatpush.msra.mxu0 0.0
    %1158 = vmatpush.msra.mxu0 0.0
    %1159 = vmatpush.msra.mxu0 0.0
    %1160 = vmatpush.msra.mxu0 0.0
    %1161 = vmatpush.msra.mxu0 0.0
    %1162 = vmatpush.msra.mxu0 0.0
    %1163 = vmatpush.msra.mxu0 0.0
    %1164 = vmatpush.msra.mxu0 0.0
    %1165 = vmatpush.msra.mxu0 0.0
    %1166 = vmatpush.msra.mxu0 0.0
    %1167 = vmatpush.msra.mxu0 0.0
    %1168 = vmatpush.msra.mxu0 %v1143
    %1169 = vmatpush.msra.mxu0 %v1142
    %1170 = vmatpush.msra.mxu0 %v1141
    %1171 = vmatpush.msra.mxu0 %v1140
    %1172 = vmatmul.f32.gmra.mxu0 %v1145
    %v1173 = vpop.f32.mrf.mxu0
    %v1174 = vadd.f32 0.0, %v1173
    %1175 = vmatmul.f32.gmra.mxu0 %v1148
    %v1176 = vpop.f32.mrf.mxu0
    %v1177 = vadd.f32 0.0, %v1176
    %1178 = vmatmul.f32.gmra.mxu0 %v1151
    %v1179 = vpop.f32.mrf.mxu0
    %v1180 = vadd.f32 0.0, %v1179
    %1181 = vmatmul.f32.gmra.mxu0 %v1154
    %v1182 = vpop.f32.mrf.mxu0
    %v1183 = vadd.f32 0.0, %v1182
    %1184 = vdwg.mxu0
    %1185 = vmatpush.msra.mxu0 0.0
    %1186 = vmatpush.msra.mxu0 0.0
    %1187 = vmatpush.msra.mxu0 0.0
    %1188 = vmatpush.msra.mxu0 0.0
    %1189 = vmatpush.msra.mxu0 0.0
    %1190 = vmatpush.msra.mxu0 0.0
    %1191 = vmatpush.msra.mxu0 0.0
    %1192 = vmatpush.msra.mxu0 0.0
    %1193 = vmatpush.msra.mxu0 0.0
    %1194 = vmatpush.msra.mxu0 0.0
    %1195 = vmatpush.msra.mxu0 0.0
    %1196 = vmatpush.msra.mxu0 0.0
    %1197 = vmatpush.msra.mxu0 %v1139
    %1198 = vmatpush.msra.mxu0 %v1138
    %1199 = vmatpush.msra.mxu0 %v1137
    %1200 = vmatpush.msra.mxu0 %v1136
    %1201 = vmatmul.f32.gmra.mxu0 %v159
    %v1202 = vpop.f32.mrf.mxu0
    %v1203 = vadd.f32 %v1174, %v1202
    %1204 = vmatmul.f32.gmra.mxu0 %v162
    %v1205 = vpop.f32.mrf.mxu0
    %v1206 = vadd.f32 %v1177, %v1205
    %1207 = vmatmul.f32.gmra.mxu0 %v165
    %v1208 = vpop.f32.mrf.mxu0
    %v1209 = vadd.f32 %v1180, %v1208
    %1210 = vmatmul.f32.gmra.mxu0 %v168
    %v1211 = vpop.f32.mrf.mxu0
    %v1212 = vadd.f32 %v1183, %v1211
    %1213 = vdwg.mxu0
    %v1214 = vld [vmem:[#allocation10] sm:$0x1]
    %v1216 = vperm.slane %v1214, 0
    %v1218 = vadd.f32 %v1203, %v1216
    %v1219 = vadd.f32 %v1206, %v1216
    %v1220 = vadd.f32 %v1209, %v1216
    %v1221 = vadd.f32 %v1212, %v1216
    %vm1222 = vcmask 523264
    %v1223 = vsel %vm1222, %v1218, 0.0
    %v1224 = vsel %vm1222, %v1219, 0.0
    %v1225 = vadd.f32 %v1223, %v1224
    %v1226 = vsel %vm1222, %v1220, 0.0
    %v1227 = vadd.f32 %v1225, %v1226
    %v1228 = vsel %vm1222, %v1221, 0.0
    %v1229 = vadd.f32 %v1227, %v1228
    %v1230 = vrot.slane %v1229, 4
    %v1231 = vadd.f32 %v1229, %v1230
    %v1232 = vrot.slane %v1231, 2
    %v1233 = vadd.f32 %v1231, %v1232
    %v1234 = vrot.slane %v1233, 1
    %v1235 = vadd.f32 %v1233, %v1234
    %v1236 = vrcp.pop 32.0
    %v1237 = vmul.f32 32.0, %v1236
    %v1238 = vsub.f32 1.0, %v1237
    %v1239 = vmul.f32 %v1236, %v1238
    %v1240 = vadd.f32 %v1236, %v1239
    %vm1241 = vweird.f32 %v1236
    %v1242 = vsel %vm1241, %v1236, %v1240
    %v1243 = vmul.f32 %v1235, %v1242
    %v1244 = vsub.f32 %v1218, %v1243
    %v1245 = vsub.f32 %v1219, %v1243
    %v1246 = vsub.f32 %v1220, %v1243
    %v1247 = vsub.f32 %v1221, %v1243
    %v1248 = vmul.f32 %v1244, %v1244
    %v1249 = vmul.f32 %v1245, %v1245
    %v1250 = vmul.f32 %v1246, %v1246
    %v1251 = vmul.f32 %v1247, %v1247
    %v1252 = vsel %vm1222, %v1248, 0.0
    %v1253 = vsel %vm1222, %v1249, 0.0
    %v1254 = vadd.f32 %v1252, %v1253
    %v1255 = vsel %vm1222, %v1250, 0.0
    %v1256 = vadd.f32 %v1254, %v1255
    %v1257 = vsel %vm1222, %v1251, 0.0
    %v1258 = vadd.f32 %v1256, %v1257
    %v1259 = vrot.slane %v1258, 4
    %v1260 = vadd.f32 %v1258, %v1259
    %v1261 = vrot.slane %v1260, 2
    %v1262 = vadd.f32 %v1260, %v1261
    %v1263 = vrot.slane %v1262, 1
    %v1264 = vadd.f32 %v1262, %v1263
    %v1265 = vmul.f32 %v1264, %v1242
    %v1266 = vadd.f32 %v1265, 1e-05
    %v1267 = vrsqrt.pop %v1266
    %v1268 = vmul.f32 %v1267, %v1266
    %v1269 = vmul.f32 %v1268, %v1267
    %v1270 = vmul.f32 0.5, %v1269
    %v1271 = vsub.f32 1.5, %v1270
    %v1272 = vmul.f32 %v1267, %v1271
    %vm1273 = vweird.f32 %v1266
    %vm1274 = vweird.f32 %v1267
    %vm1275 = vmor %vm1273, %vm1274
    %v1276 = vsel %vm1275, %v1267, %v1272
    %v1277 = vmul.f32 %v1244, %v1276
    %v1278 = vmul.f32 %v1245, %v1276
    %v1279 = vmul.f32 %v1246, %v1276
    %v1280 = vmul.f32 %v1247, %v1276
    %v1281 = vld [vmem:[%s11] sm:$0x1]
    %v1283 = vperm.slane %v1281, 0
    %v1285 = vmul.f32 %v1277, %v1283
    %v1286 = vmul.f32 %v1278, %v1283
    %v1287 = vmul.f32 %v1279, %v1283
    %v1288 = vmul.f32 %v1280, %v1283
    %v1289 = vld [vmem:[%s12] sm:$0x1]
    %v1291 = vperm.slane %v1289, 0
    %v1293 = vadd.f32 %v1285, %v1291
    %v1294 = vadd.f32 %v1286, %v1291
    %v1295 = vadd.f32 %v1287, %v1291
    %v1296 = vadd.f32 %v1288, %v1291
    %v1297 = vmax.f32 %v1293, 0.0
    %v1298 = vmax.f32 %v1294, 0.0
    %v1299 = vmax.f32 %v1295, 0.0
    %v1300 = vmax.f32 %v1296, 0.0
    %v1301 = vld [vmem:[%s13] sm:$0xff]
    %v1302 = vld [vmem:[%s13 + $0x8] sm:$0xff]
    %v1303 = vld [vmem:[%s13 + $0x10] sm:$0xff]
    %v1304 = vld [vmem:[%s13 + $0x18] sm:$0xff]
    %v1305 = vld [vmem:[%s13 + $0x20] sm:$0xff]
    %v1306 = vld [vmem:[%s13 + $0x28] sm:$0xff]
    %v1307 = vld [vmem:[%s13 + $0x30] sm:$0xff]
    %v1308 = vld [vmem:[%s13 + $0x38] sm:$0xff]
    %v1309 = vld [vmem:[#allocation11] sm:$0x1]
    %v1311 = vperm.slane %v1309, 0
    %v1314 = vsel %vm1222, %v1297, 0
    %v1317 = vsel %vm1222, %v1298, 0
    %v1320 = vsel %vm1222, %v1299, 0
    %v1323 = vsel %vm1222, %v1300, 0
    %1325 = vmatpush.msra.mxu0 0.0
    %1326 = vmatpush.msra.mxu0 0.0
    %1327 = vmatpush.msra.mxu0 0.0
    %1328 = vmatpush.msra.mxu0 0.0
    %1329 = vmatpush.msra.mxu0 0.0
    %1330 = vmatpush.msra.mxu0 0.0
    %1331 = vmatpush.msra.mxu0 0.0
    %1332 = vmatpush.msra.mxu0 0.0
    %1333 = vmatpush.msra.mxu0 %v1308
    %1334 = vmatpush.msra.mxu0 %v1307
    %1335 = vmatpush.msra.mxu0 %v1306
    %1336 = vmatpush.msra.mxu0 %v1305
    %1337 = vmatpush.msra.mxu0 %v1304
    %1338 = vmatpush.msra.mxu0 %v1303
    %1339 = vmatpush.msra.mxu0 %v1302
    %1340 = vmatpush.msra.mxu0 %v1301
    %1341 = vmatmul.f32.gmra.mxu0 %v1314
    %v1342 = vpop.f32.mrf.mxu0
    %v1343 = vadd.f32 %v1311, %v1342
    %1344 = vmatmul.f32.gmra.mxu0 %v1317
    %v1345 = vpop.f32.mrf.mxu0
    %v1346 = vadd.f32 %v1311, %v1345
    %1347 = vmatmul.f32.gmra.mxu0 %v1320
    %v1348 = vpop.f32.mrf.mxu0
    %v1349 = vadd.f32 %v1311, %v1348
    %1350 = vmatmul.f32.gmra.mxu0 %v1323
    %v1351 = vpop.f32.mrf.mxu0
    %v1352 = vadd.f32 %v1311, %v1351
    %1353 = vdwg.mxu0
    %1354 = vst.msk [vmem:[#allocation13] sm:$0xff] %vm157, %v1343
    %1355 = vst.msk [vmem:[#allocation13 + $0x8] sm:$0xff] %vm157, %v1346
    %1356 = vst.msk [vmem:[#allocation13 + $0x10] sm:$0xff] %vm157, %v1349
    %1357 = vst.msk [vmem:[#allocation13 + $0x18] sm:$0xff] %vm157, %v1352
    // Predicated region
    $region86: #{attentional_propagation.1} parent=1 // pred_check
      _
    $region87: #{attentional_propagation.1} parent=1 // pred_check_branch
      %1359 = sbr.rel (0) target = $region89
    $region88: #{attentional_propagation.1} parent=1 // pred_region
      %1361 = vsyncadd [#allocation4], 0
      %s1362 = sshll.u32 [#allocation13], 4
      %s1363 = int_to_ptr.vmem [resolvable:$true] %s1362
      %s1364 = sshll.u32 %s15, 4
      %s1365 = int_to_ptr.hbm [resolvable:$true] %s1364
      %1370 = dma.vmem_to_hbm [thread:$0]  %s1363, 512, %s1365, [#allocation4], 128, 128, 8
    $region89: #{attentional_propagation.1} parent=1 // pred_fallthru
      _
    // Predicated region
    $region90: #{attentional_propagation.1} parent=1 // pred_check
      _
    $region91: #{attentional_propagation.1} parent=1 // pred_check_branch
      %1372 = sbr.rel (0) target = $region93
    $region92: #{attentional_propagation.1} parent=1 // pred_region
      %1374 = dma.done [#allocation4], 512
    $region93: #{attentional_propagation.1} parent=1 // pred_fallthru
      _
    %1375 = vsyncpa [#allocation3], 1
    %1376 = vsyncpa [#allocation6], 1
    %1377 = vsyncpa [#allocation9], 1
    %1378 = vsyncpa [#allocation12], 1
    %1379 = vsyncpa [#allocation4], 1

</llo_original>
